<compile_context>
chip_gen: v7x
topology: tpu7x:2x2x1
jax: 0.10.0
libtpu: 0.0.40
codegen_flags: <defaults>
</compile_context>

<pallas_src>
import jax
import jax.numpy as jnp
from jax.experimental import pallas as pl
from jax.experimental.pallas import tpu as pltpu

BN_EPS = 1e-5


def mobilenet_block_kernel(
    x_ref,            # (N, H, W, Cs)   f32 input (NHWC)
    w1_ref,           # (Cs, Ce)        bf16 1x1 expand weight (x @ W layout)
    g1_ref, b1_ref,   # (1, Ce)         f32 BN1 gamma / beta
    wdw_ref,          # (9, Ce)         f32 depthwise 3x3 weights, row = kh*3+kw
    g2_ref, b2_ref,   # (1, Ce)         f32 BN2 gamma / beta
    w2_ref,           # (Ce, Cs)        bf16 1x1 project weight
    g3_ref, b3_ref,   # (1, Cs)         f32 BN3 gamma / beta
    fc1_ref,          # (Cs, Cr)        bf16 SE fc1 (no bias)
    fc2_ref,          # (Cr, Cs)        bf16 SE fc2 (no bias)
    out_ref,          # (N, H, W, Cs)   f32 output
):
    N, H, W, Cs = x_ref.shape
    Ce = w1_ref.shape[1]

    def sigmoid(v):
        # exp lands on the EUP; approximate reciprocal also lands on the EUP,
        # keeping the whole sigmoid off the (busier) VALU slots.
        return pl.reciprocal(1.0 + jnp.exp(-v), approx=True)

    def swish(v):  # Swish(beta=1.0)
        return v * sigmoid(v)

    def bn_train(h, gamma, beta):
        # Batch-stat BN over all rows (N*H*W), biased variance, like
        # nn.BatchNorm2d in training mode.  Centered-square variance for
        # numerical robustness.
        mean = jnp.mean(h, axis=0, keepdims=True)
        c = h - mean
        var = jnp.mean(c * c, axis=0, keepdims=True)
        return c * (gamma * jax.lax.rsqrt(var + BN_EPS)) + beta

    x = x_ref[...]                                   # (N, H, W, Cs) f32
    xf = x.reshape(N * H * W, Cs)

    # ---- conv1: 1x1 expand (MXU, bf16 in / f32 acc) + BN1 + Swish ----
    h = jnp.dot(xf.astype(jnp.bfloat16), w1_ref[...],
                preferred_element_type=jnp.float32)          # (NHW, Ce)
    h = swish(bn_train(h, g1_ref[...], b1_ref[...]))
    h4 = h.reshape(N, H, W, Ce)

    # ---- depthwise 3x3, padding=1 (no padded scratch buffer) ----
    # W shifts: 3 zero-column concats along the sublane axis, computed once.
    # H shifts: zero-row padding + slicing along the major H axis (aligned,
    # cheap).  tap_{kh,kw}[h, w] = h4[h + kh - 1, w + kw - 1] with zero padding.
    wdw = wdw_ref[...]                                        # (9, Ce)
    zcol = jnp.zeros((N, H, 1, Ce), jnp.float32)
    zrow = jnp.zeros((N, 1, W, Ce), jnp.float32)
    shifted_w = (
        jnp.concatenate([zcol, h4[:, :, :W - 1, :]], axis=2),  # in[w - 1]
        h4,                                                    # in[w]
        jnp.concatenate([h4[:, :, 1:, :], zcol], axis=2),      # in[w + 1]
    )
    acc = jnp.zeros((N, H, W, Ce), jnp.float32)
    for kw in range(3):
        padded_h = jnp.concatenate([zrow, shifted_w[kw], zrow], axis=1)  # (N,H+2,W,Ce)
        for kh in range(3):
            tap = padded_h[:, kh:kh + H]                       # in[h + kh - 1]
            acc = acc + tap * wdw[kh * 3 + kw].reshape(1, 1, 1, Ce)

    h = swish(bn_train(acc.reshape(N * H * W, Ce), g2_ref[...], b2_ref[...]))

    # ---- conv2: 1x1 project (MXU, bf16 in / f32 acc) + BN3 ----
    h = jnp.dot(h.astype(jnp.bfloat16), w2_ref[...],
                preferred_element_type=jnp.float32)            # (NHW, Cs)
    h = bn_train(h, g3_ref[...], b3_ref[...])

    # ---- SE: per-sample global avg pool -> fc1 -> ReLU -> fc2 -> sigmoid ----
    h3 = h.reshape(N, H * W, Cs)
    y = jnp.mean(h3, axis=1)                                   # (N, Cs)
    y = jnp.maximum(
        jnp.dot(y.astype(jnp.bfloat16), fc1_ref[...],
                preferred_element_type=jnp.float32), 0.0)      # (N, Cr)
    y = sigmoid(
        jnp.dot(y.astype(jnp.bfloat16), fc2_ref[...],
                preferred_element_type=jnp.float32))           # (N, Cs)

    # ---- SE scale + residual add ----
    # TODO(synk): fold pairs of spatial positions into the lane axis so the
    # final store is 128-lane dense (Cs=64 currently forces masked stores).
    out = h3 * y[:, None, :] + x.reshape(N, H * W, Cs)
    out_ref[...] = out.reshape(N, H, W, Cs).astype(out_ref.dtype)


def _vmem_limit_bytes():
    """Physical VMEM minus headroom (v7x has only 64 MiB per TensorCore)."""
    try:
        info = pltpu.get_tpu_info()
        cap = int(getattr(info, "vmem_capacity_bytes", 128 << 20))
    except Exception:
        cap = 128 << 20
    return max(32 << 20, min((cap * 3) // 4, 100 << 20))


def mobilenet_bottleneck_block_nhwc(x_nhwc, params):
    """x_nhwc: (N, H, W, Cs) float32, channels-last. Returns same shape/layout."""
    N, H, W, Cs = x_nhwc.shape
    Ce = params["w1"].shape[1]
    Cr = params["fc1"].shape[1]
    bf16 = jnp.bfloat16

    args = [
        x_nhwc.astype(jnp.float32),
        params["w1"].astype(bf16), params["g1"], params["b1"],
        params["wdw"].astype(jnp.float32), params["g2"], params["b2"],
        params["w2"].astype(bf16), params["g3"], params["b3"],
        params["fc1"].astype(bf16), params["fc2"].astype(bf16),
    ]

    def full_spec(shape):
        nd = len(shape)
        return pl.BlockSpec(shape, lambda i, _nd=nd: (0,) * _nd)

    nhw = N * H * W
    flops = (2 * nhw * Cs * Ce          # 1x1 expand
             + 2 * nhw * 9 * Ce         # depthwise 3x3
             + 2 * nhw * Ce * Cs        # 1x1 project
             + 2 * N * Cs * Cr          # SE fc1
             + 2 * N * Cr * Cs)         # SE fc2
    transcendentals = 2 * nhw * Ce + N * Cs          # swish exps + SE sigmoid
    bytes_accessed = (4 * nhw * Cs * 2                               # x + out
                      + 2 * (Cs * Ce + Ce * Cs + Cs * Cr + Cr * Cs)  # bf16 weights
                      + 4 * (9 * Ce + 4 * Ce + 2 * Cs))              # dw + BN params

    out_nhwc = pl.pallas_call(
        mobilenet_block_kernel,
        out_shape=jax.ShapeDtypeStruct((N, H, W, Cs), jnp.float32),
        grid_spec=pltpu.PrefetchScalarGridSpec(
            num_scalar_prefetch=0,
            grid=(1,),
            in_specs=[full_spec(a.shape) for a in args],
            out_specs=full_spec((N, H, W, Cs)),
        ),
        compiler_params=pltpu.CompilerParams(
            dimension_semantics=("arbitrary",),
            vmem_limit_bytes=_vmem_limit_bytes(),
        ),
        cost_estimate=pl.CostEstimate(
            flops=flops,
            transcendentals=transcendentals,
            bytes_accessed=bytes_accessed,
        ),
    )(*args)
    return out_nhwc


def mobilenet_bottleneck_block_nchw(x_nchw, params):
    """Compatibility shim for PyTorch NCHW callers (adds two HBM transposes;
    prefer the NHWC entry point)."""
    x_nhwc = jnp.transpose(x_nchw, (0, 2, 3, 1))
    out = mobilenet_bottleneck_block_nhwc(x_nhwc, params)
    return jnp.transpose(out, (0, 3, 1, 2))


def make_params(key, squeeze_channels, expand_channels, reduction=16):
    Cs, Ce = squeeze_channels, expand_channels
    Cr = Cs // reduction
    ks = jax.random.split(key, 12)
    f32 = jnp.float32
    return dict(
        # conv1 weight: PyTorch (Ce, Cs, 1, 1) -> stored as (Cs, Ce) for x @ W
        w1=(jax.random.normal(ks[0], (Cs, Ce), f32) * 0.05),
        g1=(1.0 + 0.1 * jax.random.normal(ks[1], (1, Ce), f32)),
        b1=(0.1 * jax.random.normal(ks[2], (1, Ce), f32)),
        # depthwise weight: PyTorch (Ce, 1, 3, 3) -> stored as (9, Ce)
        wdw=(jax.random.normal(ks[3], (9, Ce), f32) * 0.1),
        g2=(1.0 + 0.1 * jax.random.normal(ks[4], (1, Ce), f32)),
        b2=(0.1 * jax.random.normal(ks[5], (1, Ce), f32)),
        # conv2 weight: PyTorch (Cs, Ce, 1, 1) -> stored as (Ce, Cs)
        w2=(jax.random.normal(ks[6], (Ce, Cs), f32) * 0.05),
        g3=(1.0 + 0.1 * jax.random.normal(ks[7], (1, Cs), f32)),
        b3=(0.1 * jax.random.normal(ks[8], (1, Cs), f32)),
        # SE fc weights: PyTorch fc1 (Cr, Cs), fc2 (Cs, Cr) -> stored transposed
        fc1=(jax.random.normal(ks[9], (Cs, Cr), f32) * 0.1),
        fc2=(jax.random.normal(ks[10], (Cr, Cs), f32) * 0.1),
    )


def reference_block_nhwc(x_nhwc, params):
    """Pure-JAX f32 reference of the same forward math (for self-validation)."""
    N, H, W, Cs = x_nhwc.shape
    Ce = params["w1"].shape[1]

    def bn(h, gamma, beta):
        mean = jnp.mean(h, axis=0, keepdims=True)
        c = h - mean
        var = jnp.mean(c * c, axis=0, keepdims=True)
        return c * (gamma / jnp.sqrt(var + BN_EPS)) + beta

    def swish(h):
        return h * jax.nn.sigmoid(h)

    x = x_nhwc.astype(jnp.float32)
    xf = x.reshape(N * H * W, Cs)
    h = swish(bn(xf @ params["w1"], params["g1"], params["b1"]))
    h4 = h.reshape(N, H, W, Ce)
    hp = jnp.pad(h4, ((0, 0), (1, 1), (1, 1), (0, 0)))
    acc = jnp.zeros_like(h4)
    for kh in range(3):
        for kw in range(3):
            acc = acc + (hp[:, kh:kh + H, kw:kw + W, :]
                         * params["wdw"][kh * 3 + kw].reshape(1, 1, 1, Ce))
    h = swish(bn(acc.reshape(N * H * W, Ce), params["g2"], params["b2"]))
    h = bn(h @ params["w2"], params["g3"], params["b3"])
    h3 = h.reshape(N, H * W, Cs)
    y = jnp.mean(h3, axis=1)
    y = jax.nn.relu(y @ params["fc1"])
    y = jax.nn.sigmoid(y @ params["fc2"])
    out = h3 * y[:, None, :] + x.reshape(N, H * W, Cs)
    return out.reshape(N, H, W, Cs)


if __name__ == "__main__":
    key = jax.random.PRNGKey(0)
    k_x, k_p = jax.random.split(key)

    # Module defaults: squeeze=64, expand=256. Small spatial extent for the demo.
    N, Cs, Ce, H, W = 2, 64, 256, 8, 8
    # NHWC (channels-last) input — no boundary transposes needed for the kernel.
    x = jax.random.normal(k_x, (N, H, W, Cs), jnp.float32)
    params = make_params(k_p, squeeze_channels=Cs, expand_channels=Ce)

    out = mobilenet_bottleneck_block_nhwc(x, params)
    out = jax.block_until_ready(out)

    assert out.shape == (N, H, W, Cs)
    assert out.dtype == jnp.float32
    assert bool(jnp.all(jnp.isfinite(out)))

    # Loose self-check vs. pure-JAX f32 reference (bf16 MXU + approx reciprocal
    # introduce ~1e-2-scale differences; anything structural would blow this up).
    ref = reference_block_nhwc(x, params)
    max_diff = float(jnp.max(jnp.abs(out - ref)))
    assert max_diff < 0.15, max_diff

    print("KERNEL_OK")
</pallas_src>

<mosaic_0001>
module attributes {stable_mosaic.version = 11 : i64} {
  func.func @mobilenet_block_kernel(%arg0: i32, %arg1: memref<2x8x8x64xf32, #tpu.memory_space<vmem>>, %arg2: memref<64x256xbf16, #tpu.memory_space<vmem>>, %arg3: memref<1x256xf32, #tpu.memory_space<vmem>>, %arg4: memref<1x256xf32, #tpu.memory_space<vmem>>, %arg5: memref<9x256xf32, #tpu.memory_space<vmem>>, %arg6: memref<1x256xf32, #tpu.memory_space<vmem>>, %arg7: memref<1x256xf32, #tpu.memory_space<vmem>>, %arg8: memref<256x64xbf16, #tpu.memory_space<vmem>>, %arg9: memref<1x64xf32, #tpu.memory_space<vmem>>, %arg10: memref<1x64xf32, #tpu.memory_space<vmem>>, %arg11: memref<64x4xbf16, #tpu.memory_space<vmem>>, %arg12: memref<4x64xbf16, #tpu.memory_space<vmem>>, %arg13: memref<2x8x8x64xf32, #tpu.memory_space<vmem>>) attributes {dimension_semantics = [#tpu.dimension_semantics<arbitrary>], iteration_bounds = array<i64: 1>, scalar_prefetch = 0 : i64, scratch_operands = 0 : i64, tpu.core_type = #tpu.core_type<tc>, window_params = [{pipeline_mode = #tpu.pipeline_mode<synchronous>, transform_indices = @transform_0, window_bounds = array<i64: 2, 8, 8, 64>}, {pipeline_mode = #tpu.pipeline_mode<synchronous>, transform_indices = @transform_1, window_bounds = array<i64: 64, 256>}, {pipeline_mode = #tpu.pipeline_mode<synchronous>, transform_indices = @transform_2, window_bounds = array<i64: 1, 256>}, {pipeline_mode = #tpu.pipeline_mode<synchronous>, transform_indices = @transform_3, window_bounds = array<i64: 1, 256>}, {pipeline_mode = #tpu.pipeline_mode<synchronous>, transform_indices = @transform_4, window_bounds = array<i64: 9, 256>}, {pipeline_mode = #tpu.pipeline_mode<synchronous>, transform_indices = @transform_5, window_bounds = array<i64: 1, 256>}, {pipeline_mode = #tpu.pipeline_mode<synchronous>, transform_indices = @transform_6, window_bounds = array<i64: 1, 256>}, {pipeline_mode = #tpu.pipeline_mode<synchronous>, transform_indices = @transform_7, window_bounds = array<i64: 256, 64>}, {pipeline_mode = #tpu.pipeline_mode<synchronous>, transform_indices = @transform_8, window_bounds = array<i64: 1, 64>}, {pipeline_mode = #tpu.pipeline_mode<synchronous>, transform_indices = @transform_9, window_bounds = array<i64: 1, 64>}, {pipeline_mode = #tpu.pipeline_mode<synchronous>, transform_indices = @transform_10, window_bounds = array<i64: 64, 4>}, {pipeline_mode = #tpu.pipeline_mode<synchronous>, transform_indices = @transform_11, window_bounds = array<i64: 4, 64>}, {pipeline_mode = #tpu.pipeline_mode<synchronous>, transform_indices = @transform_12, window_bounds = array<i64: 2, 8, 8, 64>}]} {
    %c0 = arith.constant 0 : index
    %c0_0 = arith.constant 0 : index
    %c0_1 = arith.constant 0 : index
    %c0_2 = arith.constant 0 : index
    %0 = vector.load %arg1[%c0, %c0_0, %c0_1, %c0_2] : memref<2x8x8x64xf32, #tpu.memory_space<vmem>>, vector<2x8x8x64xf32>
    %1 = vector.shape_cast %0 : vector<2x8x8x64xf32> to vector<128x64xf32>
    %2 = arith.truncf %1 : vector<128x64xf32> to vector<128x64xbf16>
    %c0_3 = arith.constant 0 : index
    %c0_4 = arith.constant 0 : index
    %3 = vector.load %arg2[%c0_3, %c0_4] : memref<64x256xbf16, #tpu.memory_space<vmem>>, vector<64x256xbf16>
    %cst = arith.constant dense<0.000000e+00> : vector<128x256xf32>
    %4 = tpu.matmul %2, %3, %cst {dimension_numbers = #tpu.dot_dimension_numbers<[1], [0], [0], [1], [0, 0, 1, 1], [], []>} : vector<128x64xbf16>, vector<64x256xbf16>, vector<128x256xf32> -> vector<128x256xf32>
    %c0_5 = arith.constant 0 : index
    %c0_6 = arith.constant 0 : index
    %5 = vector.load %arg3[%c0_5, %c0_6] : memref<1x256xf32, #tpu.memory_space<vmem>>, vector<1x256xf32>
    %c0_7 = arith.constant 0 : index
    %c0_8 = arith.constant 0 : index
    %6 = vector.load %arg4[%c0_7, %c0_8] : memref<1x256xf32, #tpu.memory_space<vmem>>, vector<1x256xf32>
    %cst_9 = arith.constant dense<0.000000e+00> : vector<256xf32>
    %7 = vector.multi_reduction <add>, %4, %cst_9 [0] : vector<128x256xf32> to vector<256xf32>
    %8 = vector.shape_cast %7 : vector<256xf32> to vector<1x256xf32>
    %cst_10 = arith.constant 1.280000e+02 : f32
    %9 = vector.broadcast %cst_10 : f32 to vector<1x256xf32>
    %10 = arith.divf %8, %9 : vector<1x256xf32>
    %11 = vector.broadcast %10 : vector<1x256xf32> to vector<128x256xf32>
    %12 = arith.subf %4, %11 : vector<128x256xf32>
    %13 = arith.mulf %12, %12 : vector<128x256xf32>
    %cst_11 = arith.constant dense<0.000000e+00> : vector<256xf32>
    %14 = vector.multi_reduction <add>, %13, %cst_11 [0] : vector<128x256xf32> to vector<256xf32>
    %15 = vector.shape_cast %14 : vector<256xf32> to vector<1x256xf32>
    %cst_12 = arith.constant 1.280000e+02 : f32
    %16 = vector.broadcast %cst_12 : f32 to vector<1x256xf32>
    %17 = arith.divf %15, %16 : vector<1x256xf32>
    %cst_13 = arith.constant 9.99999974E-6 : f32
    %18 = vector.broadcast %cst_13 : f32 to vector<1x256xf32>
    %19 = arith.addf %17, %18 : vector<1x256xf32>
    %20 = math.rsqrt %19 : vector<1x256xf32>
    %21 = arith.mulf %5, %20 : vector<1x256xf32>
    %22 = vector.broadcast %21 : vector<1x256xf32> to vector<128x256xf32>
    %23 = arith.mulf %12, %22 : vector<128x256xf32>
    %24 = vector.broadcast %6 : vector<1x256xf32> to vector<128x256xf32>
    %25 = arith.addf %23, %24 : vector<128x256xf32>
    %cst_14 = arith.constant 0.000000e+00 : f32
    %26 = vector.broadcast %cst_14 : f32 to vector<128x256xf32>
    %27 = arith.subf %26, %25 : vector<128x256xf32>
    %28 = math.exp %27 : vector<128x256xf32>
    %cst_15 = arith.constant 1.000000e+00 : f32
    %29 = vector.broadcast %cst_15 : f32 to vector<128x256xf32>
    %30 = arith.addf %29, %28 : vector<128x256xf32>
    %31 = tpu.reciprocal %30 {approx = true} : vector<128x256xf32> -> vector<128x256xf32>
    %32 = arith.mulf %25, %31 : vector<128x256xf32>
    %33 = vector.shape_cast %32 : vector<128x256xf32> to vector<2x8x8x256xf32>
    %c0_16 = arith.constant 0 : index
    %c0_17 = arith.constant 0 : index
    %34 = vector.load %arg5[%c0_16, %c0_17] : memref<9x256xf32, #tpu.memory_space<vmem>>, vector<9x256xf32>
    %cst_18 = arith.constant 0.000000e+00 : f32
    %35 = vector.broadcast %cst_18 : f32 to vector<2x8x1x256xf32>
    %cst_19 = arith.constant 0.000000e+00 : f32
    %36 = vector.broadcast %cst_19 : f32 to vector<2x1x8x256xf32>
    %37 = vector.extract_strided_slice %33 {offsets = [0, 0, 0, 0], sizes = [2, 8, 7, 256], strides = [1, 1, 1, 1]} : vector<2x8x8x256xf32> to vector<2x8x7x256xf32>
    %38 = tpu.concatenate %35, %37 in 2 : vector<2x8x1x256xf32>, vector<2x8x7x256xf32> -> vector<2x8x8x256xf32>
    %39 = vector.extract_strided_slice %33 {offsets = [0, 0, 1, 0], sizes = [2, 8, 7, 256], strides = [1, 1, 1, 1]} : vector<2x8x8x256xf32> to vector<2x8x7x256xf32>
    %40 = tpu.concatenate %39, %35 in 2 : vector<2x8x7x256xf32>, vector<2x8x1x256xf32> -> vector<2x8x8x256xf32>
    %cst_20 = arith.constant 0.000000e+00 : f32
    %41 = vector.broadcast %cst_20 : f32 to vector<2x8x8x256xf32>
    %42 = tpu.concatenate %36, %38, %36 in 1 : vector<2x1x8x256xf32>, vector<2x8x8x256xf32>, vector<2x1x8x256xf32> -> vector<2x10x8x256xf32>
    %43 = vector.extract_strided_slice %42 {offsets = [0, 0, 0, 0], sizes = [2, 8, 8, 256], strides = [1, 1, 1, 1]} : vector<2x10x8x256xf32> to vector<2x8x8x256xf32>
    %44 = vector.extract_strided_slice %34 {offsets = [0, 0], sizes = [1, 256], strides = [1, 1]} : vector<9x256xf32> to vector<1x256xf32>
    %45 = vector.shape_cast %44 : vector<1x256xf32> to vector<256xf32>
    %46 = vector.shape_cast %45 : vector<256xf32> to vector<1x1x1x256xf32>
    %47 = vector.broadcast %46 : vector<1x1x1x256xf32> to vector<2x8x8x256xf32>
    %48 = arith.mulf %43, %47 : vector<2x8x8x256xf32>
    %49 = arith.addf %41, %48 : vector<2x8x8x256xf32>
    %50 = vector.extract_strided_slice %42 {offsets = [0, 1, 0, 0], sizes = [2, 8, 8, 256], strides = [1, 1, 1, 1]} : vector<2x10x8x256xf32> to vector<2x8x8x256xf32>
    %51 = vector.extract_strided_slice %34 {offsets = [3, 0], sizes = [1, 256], strides = [1, 1]} : vector<9x256xf32> to vector<1x256xf32>
    %52 = vector.shape_cast %51 : vector<1x256xf32> to vector<256xf32>
    %53 = vector.shape_cast %52 : vector<256xf32> to vector<1x1x1x256xf32>
    %54 = vector.broadcast %53 : vector<1x1x1x256xf32> to vector<2x8x8x256xf32>
    %55 = arith.mulf %50, %54 : vector<2x8x8x256xf32>
    %56 = arith.addf %49, %55 : vector<2x8x8x256xf32>
    %57 = vector.extract_strided_slice %42 {offsets = [0, 2, 0, 0], sizes = [2, 8, 8, 256], strides = [1, 1, 1, 1]} : vector<2x10x8x256xf32> to vector<2x8x8x256xf32>
    %58 = vector.extract_strided_slice %34 {offsets = [6, 0], sizes = [1, 256], strides = [1, 1]} : vector<9x256xf32> to vector<1x256xf32>
    %59 = vector.shape_cast %58 : vector<1x256xf32> to vector<256xf32>
    %60 = vector.shape_cast %59 : vector<256xf32> to vector<1x1x1x256xf32>
    %61 = vector.broadcast %60 : vector<1x1x1x256xf32> to vector<2x8x8x256xf32>
    %62 = arith.mulf %57, %61 : vector<2x8x8x256xf32>
    %63 = arith.addf %56, %62 : vector<2x8x8x256xf32>
    %64 = tpu.concatenate %36, %33, %36 in 1 : vector<2x1x8x256xf32>, vector<2x8x8x256xf32>, vector<2x1x8x256xf32> -> vector<2x10x8x256xf32>
    %65 = vector.extract_strided_slice %64 {offsets = [0, 0, 0, 0], sizes = [2, 8, 8, 256], strides = [1, 1, 1, 1]} : vector<2x10x8x256xf32> to vector<2x8x8x256xf32>
    %66 = vector.extract_strided_slice %34 {offsets = [1, 0], sizes = [1, 256], strides = [1, 1]} : vector<9x256xf32> to vector<1x256xf32>
    %67 = vector.shape_cast %66 : vector<1x256xf32> to vector<256xf32>
    %68 = vector.shape_cast %67 : vector<256xf32> to vector<1x1x1x256xf32>
    %69 = vector.broadcast %68 : vector<1x1x1x256xf32> to vector<2x8x8x256xf32>
    %70 = arith.mulf %65, %69 : vector<2x8x8x256xf32>
    %71 = arith.addf %63, %70 : vector<2x8x8x256xf32>
    %72 = vector.extract_strided_slice %64 {offsets = [0, 1, 0, 0], sizes = [2, 8, 8, 256], strides = [1, 1, 1, 1]} : vector<2x10x8x256xf32> to vector<2x8x8x256xf32>
    %73 = vector.extract_strided_slice %34 {offsets = [4, 0], sizes = [1, 256], strides = [1, 1]} : vector<9x256xf32> to vector<1x256xf32>
    %74 = vector.shape_cast %73 : vector<1x256xf32> to vector<256xf32>
    %75 = vector.shape_cast %74 : vector<256xf32> to vector<1x1x1x256xf32>
    %76 = vector.broadcast %75 : vector<1x1x1x256xf32> to vector<2x8x8x256xf32>
    %77 = arith.mulf %72, %76 : vector<2x8x8x256xf32>
    %78 = arith.addf %71, %77 : vector<2x8x8x256xf32>
    %79 = vector.extract_strided_slice %64 {offsets = [0, 2, 0, 0], sizes = [2, 8, 8, 256], strides = [1, 1, 1, 1]} : vector<2x10x8x256xf32> to vector<2x8x8x256xf32>
    %80 = vector.extract_strided_slice %34 {offsets = [7, 0], sizes = [1, 256], strides = [1, 1]} : vector<9x256xf32> to vector<1x256xf32>
    %81 = vector.shape_cast %80 : vector<1x256xf32> to vector<256xf32>
    %82 = vector.shape_cast %81 : vector<256xf32> to vector<1x1x1x256xf32>
    %83 = vector.broadcast %82 : vector<1x1x1x256xf32> to vector<2x8x8x256xf32>
    %84 = arith.mulf %79, %83 : vector<2x8x8x256xf32>
    %85 = arith.addf %78, %84 : vector<2x8x8x256xf32>
    %86 = tpu.concatenate %36, %40, %36 in 1 : vector<2x1x8x256xf32>, vector<2x8x8x256xf32>, vector<2x1x8x256xf32> -> vector<2x10x8x256xf32>
    %87 = vector.extract_strided_slice %86 {offsets = [0, 0, 0, 0], sizes = [2, 8, 8, 256], strides = [1, 1, 1, 1]} : vector<2x10x8x256xf32> to vector<2x8x8x256xf32>
    %88 = vector.extract_strided_slice %34 {offsets = [2, 0], sizes = [1, 256], strides = [1, 1]} : vector<9x256xf32> to vector<1x256xf32>
    %89 = vector.shape_cast %88 : vector<1x256xf32> to vector<256xf32>
    %90 = vector.shape_cast %89 : vector<256xf32> to vector<1x1x1x256xf32>
    %91 = vector.broadcast %90 : vector<1x1x1x256xf32> to vector<2x8x8x256xf32>
    %92 = arith.mulf %87, %91 : vector<2x8x8x256xf32>
    %93 = arith.addf %85, %92 : vector<2x8x8x256xf32>
    %94 = vector.extract_strided_slice %86 {offsets = [0, 1, 0, 0], sizes = [2, 8, 8, 256], strides = [1, 1, 1, 1]} : vector<2x10x8x256xf32> to vector<2x8x8x256xf32>
    %95 = vector.extract_strided_slice %34 {offsets = [5, 0], sizes = [1, 256], strides = [1, 1]} : vector<9x256xf32> to vector<1x256xf32>
    %96 = vector.shape_cast %95 : vector<1x256xf32> to vector<256xf32>
    %97 = vector.shape_cast %96 : vector<256xf32> to vector<1x1x1x256xf32>
    %98 = vector.broadcast %97 : vector<1x1x1x256xf32> to vector<2x8x8x256xf32>
    %99 = arith.mulf %94, %98 : vector<2x8x8x256xf32>
    %100 = arith.addf %93, %99 : vector<2x8x8x256xf32>
    %101 = vector.extract_strided_slice %86 {offsets = [0, 2, 0, 0], sizes = [2, 8, 8, 256], strides = [1, 1, 1, 1]} : vector<2x10x8x256xf32> to vector<2x8x8x256xf32>
    %102 = vector.extract_strided_slice %34 {offsets = [8, 0], sizes = [1, 256], strides = [1, 1]} : vector<9x256xf32> to vector<1x256xf32>
    %103 = vector.shape_cast %102 : vector<1x256xf32> to vector<256xf32>
    %104 = vector.shape_cast %103 : vector<256xf32> to vector<1x1x1x256xf32>
    %105 = vector.broadcast %104 : vector<1x1x1x256xf32> to vector<2x8x8x256xf32>
    %106 = arith.mulf %101, %105 : vector<2x8x8x256xf32>
    %107 = arith.addf %100, %106 : vector<2x8x8x256xf32>
    %108 = vector.shape_cast %107 : vector<2x8x8x256xf32> to vector<128x256xf32>
    %c0_21 = arith.constant 0 : index
    %c0_22 = arith.constant 0 : index
    %109 = vector.load %arg6[%c0_21, %c0_22] : memref<1x256xf32, #tpu.memory_space<vmem>>, vector<1x256xf32>
    %c0_23 = arith.constant 0 : index
    %c0_24 = arith.constant 0 : index
    %110 = vector.load %arg7[%c0_23, %c0_24] : memref<1x256xf32, #tpu.memory_space<vmem>>, vector<1x256xf32>
    %cst_25 = arith.constant dense<0.000000e+00> : vector<256xf32>
    %111 = vector.multi_reduction <add>, %108, %cst_25 [0] : vector<128x256xf32> to vector<256xf32>
    %112 = vector.shape_cast %111 : vector<256xf32> to vector<1x256xf32>
    %cst_26 = arith.constant 1.280000e+02 : f32
    %113 = vector.broadcast %cst_26 : f32 to vector<1x256xf32>
    %114 = arith.divf %112, %113 : vector<1x256xf32>
    %115 = vector.broadcast %114 : vector<1x256xf32> to vector<128x256xf32>
    %116 = arith.subf %108, %115 : vector<128x256xf32>
    %117 = arith.mulf %116, %116 : vector<128x256xf32>
    %cst_27 = arith.constant dense<0.000000e+00> : vector<256xf32>
    %118 = vector.multi_reduction <add>, %117, %cst_27 [0] : vector<128x256xf32> to vector<256xf32>
    %119 = vector.shape_cast %118 : vector<256xf32> to vector<1x256xf32>
    %cst_28 = arith.constant 1.280000e+02 : f32
    %120 = vector.broadcast %cst_28 : f32 to vector<1x256xf32>
    %121 = arith.divf %119, %120 : vector<1x256xf32>
    %cst_29 = arith.constant 9.99999974E-6 : f32
    %122 = vector.broadcast %cst_29 : f32 to vector<1x256xf32>
    %123 = arith.addf %121, %122 : vector<1x256xf32>
    %124 = math.rsqrt %123 : vector<1x256xf32>
    %125 = arith.mulf %109, %124 : vector<1x256xf32>
    %126 = vector.broadcast %125 : vector<1x256xf32> to vector<128x256xf32>
    %127 = arith.mulf %116, %126 : vector<128x256xf32>
    %128 = vector.broadcast %110 : vector<1x256xf32> to vector<128x256xf32>
    %129 = arith.addf %127, %128 : vector<128x256xf32>
    %cst_30 = arith.constant 0.000000e+00 : f32
    %130 = vector.broadcast %cst_30 : f32 to vector<128x256xf32>
    %131 = arith.subf %130, %129 : vector<128x256xf32>
    %132 = math.exp %131 : vector<128x256xf32>
    %cst_31 = arith.constant 1.000000e+00 : f32
    %133 = vector.broadcast %cst_31 : f32 to vector<128x256xf32>
    %134 = arith.addf %133, %132 : vector<128x256xf32>
    %135 = tpu.reciprocal %134 {approx = true} : vector<128x256xf32> -> vector<128x256xf32>
    %136 = arith.mulf %129, %135 : vector<128x256xf32>
    %137 = arith.truncf %136 : vector<128x256xf32> to vector<128x256xbf16>
    %c0_32 = arith.constant 0 : index
    %c0_33 = arith.constant 0 : index
    %138 = vector.load %arg8[%c0_32, %c0_33] : memref<256x64xbf16, #tpu.memory_space<vmem>>, vector<256x64xbf16>
    %cst_34 = arith.constant dense<0.000000e+00> : vector<128x64xf32>
    %139 = tpu.matmul %137, %138, %cst_34 {dimension_numbers = #tpu.dot_dimension_numbers<[1], [0], [0], [1], [0, 0, 1, 1], [], []>} : vector<128x256xbf16>, vector<256x64xbf16>, vector<128x64xf32> -> vector<128x64xf32>
    %c0_35 = arith.constant 0 : index
    %c0_36 = arith.constant 0 : index
    %140 = vector.load %arg9[%c0_35, %c0_36] : memref<1x64xf32, #tpu.memory_space<vmem>>, vector<1x64xf32>
    %c0_37 = arith.constant 0 : index
    %c0_38 = arith.constant 0 : index
    %141 = vector.load %arg10[%c0_37, %c0_38] : memref<1x64xf32, #tpu.memory_space<vmem>>, vector<1x64xf32>
    %cst_39 = arith.constant dense<0.000000e+00> : vector<64xf32>
    %142 = vector.multi_reduction <add>, %139, %cst_39 [0] : vector<128x64xf32> to vector<64xf32>
    %143 = vector.shape_cast %142 : vector<64xf32> to vector<1x64xf32>
    %cst_40 = arith.constant 1.280000e+02 : f32
    %144 = vector.broadcast %cst_40 : f32 to vector<1x64xf32>
    %145 = arith.divf %143, %144 : vector<1x64xf32>
    %146 = vector.broadcast %145 : vector<1x64xf32> to vector<128x64xf32>
    %147 = arith.subf %139, %146 : vector<128x64xf32>
    %148 = arith.mulf %147, %147 : vector<128x64xf32>
    %cst_41 = arith.constant dense<0.000000e+00> : vector<64xf32>
    %149 = vector.multi_reduction <add>, %148, %cst_41 [0] : vector<128x64xf32> to vector<64xf32>
    %150 = vector.shape_cast %149 : vector<64xf32> to vector<1x64xf32>
    %cst_42 = arith.constant 1.280000e+02 : f32
    %151 = vector.broadcast %cst_42 : f32 to vector<1x64xf32>
    %152 = arith.divf %150, %151 : vector<1x64xf32>
    %cst_43 = arith.constant 9.99999974E-6 : f32
    %153 = vector.broadcast %cst_43 : f32 to vector<1x64xf32>
    %154 = arith.addf %152, %153 : vector<1x64xf32>
    %155 = math.rsqrt %154 : vector<1x64xf32>
    %156 = arith.mulf %140, %155 : vector<1x64xf32>
    %157 = vector.broadcast %156 : vector<1x64xf32> to vector<128x64xf32>
    %158 = arith.mulf %147, %157 : vector<128x64xf32>
    %159 = vector.broadcast %141 : vector<1x64xf32> to vector<128x64xf32>
    %160 = arith.addf %158, %159 : vector<128x64xf32>
    %161 = vector.shape_cast %160 : vector<128x64xf32> to vector<2x64x64xf32>
    %cst_44 = arith.constant dense<0.000000e+00> : vector<2x64xf32>
    %162 = vector.multi_reduction <add>, %161, %cst_44 [1] : vector<2x64x64xf32> to vector<2x64xf32>
    %cst_45 = arith.constant 6.400000e+01 : f32
    %163 = vector.broadcast %cst_45 : f32 to vector<2x64xf32>
    %164 = arith.divf %162, %163 : vector<2x64xf32>
    %165 = arith.truncf %164 : vector<2x64xf32> to vector<2x64xbf16>
    %c0_46 = arith.constant 0 : index
    %c0_47 = arith.constant 0 : index
    %166 = vector.load %arg11[%c0_46, %c0_47] : memref<64x4xbf16, #tpu.memory_space<vmem>>, vector<64x4xbf16>
    %cst_48 = arith.constant dense<0.000000e+00> : vector<2x4xf32>
    %167 = tpu.matmul %165, %166, %cst_48 {dimension_numbers = #tpu.dot_dimension_numbers<[1], [0], [0], [1], [0, 0, 1, 1], [], []>} : vector<2x64xbf16>, vector<64x4xbf16>, vector<2x4xf32> -> vector<2x4xf32>
    %cst_49 = arith.constant 0.000000e+00 : f32
    %168 = vector.broadcast %cst_49 : f32 to vector<2x4xf32>
    %169 = arith.maximumf %167, %168 : vector<2x4xf32>
    %170 = arith.truncf %169 : vector<2x4xf32> to vector<2x4xbf16>
    %c0_50 = arith.constant 0 : index
    %c0_51 = arith.constant 0 : index
    %171 = vector.load %arg12[%c0_50, %c0_51] : memref<4x64xbf16, #tpu.memory_space<vmem>>, vector<4x64xbf16>
    %cst_52 = arith.constant dense<0.000000e+00> : vector<2x64xf32>
    %172 = tpu.matmul %170, %171, %cst_52 {dimension_numbers = #tpu.dot_dimension_numbers<[1], [0], [0], [1], [0, 0, 1, 1], [], []>} : vector<2x4xbf16>, vector<4x64xbf16>, vector<2x64xf32> -> vector<2x64xf32>
    %cst_53 = arith.constant 0.000000e+00 : f32
    %173 = vector.broadcast %cst_53 : f32 to vector<2x64xf32>
    %174 = arith.subf %173, %172 : vector<2x64xf32>
    %175 = math.exp %174 : vector<2x64xf32>
    %cst_54 = arith.constant 1.000000e+00 : f32
    %176 = vector.broadcast %cst_54 : f32 to vector<2x64xf32>
    %177 = arith.addf %176, %175 : vector<2x64xf32>
    %178 = tpu.reciprocal %177 {approx = true} : vector<2x64xf32> -> vector<2x64xf32>
    %179 = vector.shape_cast %178 : vector<2x64xf32> to vector<2x1x64xf32>
    %180 = vector.broadcast %179 : vector<2x1x64xf32> to vector<2x64x64xf32>
    %181 = arith.mulf %161, %180 : vector<2x64x64xf32>
    %182 = vector.shape_cast %0 : vector<2x8x8x64xf32> to vector<2x64x64xf32>
    %183 = arith.addf %181, %182 : vector<2x64x64xf32>
    %184 = vector.shape_cast %183 : vector<2x64x64xf32> to vector<2x8x8x64xf32>
    %c0_55 = arith.constant 0 : index
    %c0_56 = arith.constant 0 : index
    %c0_57 = arith.constant 0 : index
    %c0_58 = arith.constant 0 : index
    %185 = vector.load %arg13[%c0_55, %c0_56, %c0_57, %c0_58] : memref<2x8x8x64xf32, #tpu.memory_space<vmem>>, vector<2x8x8x64xf32>
    tpu.vector_store %arg13[%c0_55, %c0_56, %c0_57, %c0_58], %184 {strides = array<i32>} : memref<2x8x8x64xf32, #tpu.memory_space<vmem>>, vector<2x8x8x64xf32>,
    return
  }
  func.func @transform_0(%arg0: i32) -> (i32, i32, i32, i32) {
    %c0_i32 = arith.constant 0 : i32
    %c0_i32_0 = arith.constant 0 : i32
    %c0_i32_1 = arith.constant 0 : i32
    %c0_i32_2 = arith.constant 0 : i32
    %c0_i32_3 = arith.constant 0 : i32
    return %c0_i32, %c0_i32_0, %c0_i32_1, %c0_i32_2 : i32, i32, i32, i32
  }
  func.func @transform_1(%arg0: i32) -> (i32, i32) {
    %c0_i32 = arith.constant 0 : i32
    %c0_i32_0 = arith.constant 0 : i32
    %c0_i32_1 = arith.constant 0 : i32
    return %c0_i32, %c0_i32_0 : i32, i32
  }
  func.func @transform_2(%arg0: i32) -> (i32, i32) {
    %c0_i32 = arith.constant 0 : i32
    %c0_i32_0 = arith.constant 0 : i32
    %c0_i32_1 = arith.constant 0 : i32
    return %c0_i32, %c0_i32_0 : i32, i32
  }
  func.func @transform_3(%arg0: i32) -> (i32, i32) {
    %c0_i32 = arith.constant 0 : i32
    %c0_i32_0 = arith.constant 0 : i32
    %c0_i32_1 = arith.constant 0 : i32
    return %c0_i32, %c0_i32_0 : i32, i32
  }
  func.func @transform_4(%arg0: i32) -> (i32, i32) {
    %c0_i32 = arith.constant 0 : i32
    %c0_i32_0 = arith.constant 0 : i32
    %c0_i32_1 = arith.constant 0 : i32
    return %c0_i32, %c0_i32_0 : i32, i32
  }
  func.func @transform_5(%arg0: i32) -> (i32, i32) {
    %c0_i32 = arith.constant 0 : i32
    %c0_i32_0 = arith.constant 0 : i32
    %c0_i32_1 = arith.constant 0 : i32
    return %c0_i32, %c0_i32_0 : i32, i32
  }
  func.func @transform_6(%arg0: i32) -> (i32, i32) {
    %c0_i32 = arith.constant 0 : i32
    %c0_i32_0 = arith.constant 0 : i32
    %c0_i32_1 = arith.constant 0 : i32
    return %c0_i32, %c0_i32_0 : i32, i32
  }
  func.func @transform_7(%arg0: i32) -> (i32, i32) {
    %c0_i32 = arith.constant 0 : i32
    %c0_i32_0 = arith.constant 0 : i32
    %c0_i32_1 = arith.constant 0 : i32
    return %c0_i32, %c0_i32_0 : i32, i32
  }
  func.func @transform_8(%arg0: i32) -> (i32, i32) {
    %c0_i32 = arith.constant 0 : i32
    %c0_i32_0 = arith.constant 0 : i32
    %c0_i32_1 = arith.constant 0 : i32
    return %c0_i32, %c0_i32_0 : i32, i32
  }
  func.func @transform_9(%arg0: i32) -> (i32, i32) {
    %c0_i32 = arith.constant 0 : i32
    %c0_i32_0 = arith.constant 0 : i32
    %c0_i32_1 = arith.constant 0 : i32
    return %c0_i32, %c0_i32_0 : i32, i32
  }
  func.func @transform_10(%arg0: i32) -> (i32, i32) {
    %c0_i32 = arith.constant 0 : i32
    %c0_i32_0 = arith.constant 0 : i32
    %c0_i32_1 = arith.constant 0 : i32
    return %c0_i32, %c0_i32_0 : i32, i32
  }
  func.func @transform_11(%arg0: i32) -> (i32, i32) {
    %c0_i32 = arith.constant 0 : i32
    %c0_i32_0 = arith.constant 0 : i32
    %c0_i32_1 = arith.constant 0 : i32
    return %c0_i32, %c0_i32_0 : i32, i32
  }
  func.func @transform_12(%arg0: i32) -> (i32, i32, i32, i32) {
    %c0_i32 = arith.constant 0 : i32
    %c0_i32_0 = arith.constant 0 : i32
    %c0_i32_1 = arith.constant 0 : i32
    %c0_i32_2 = arith.constant 0 : i32
    %c0_i32_3 = arith.constant 0 : i32
    return %c0_i32, %c0_i32_0, %c0_i32_1, %c0_i32_2 : i32, i32, i32, i32
  }
}

</mosaic_0001>

<llo_original>
// kernel: tpu_custom_call.1
$region0: #{tpu_custom_call.1}
  #allocation0 [shape = 'u32[]', space=smem, size = 0x4, offset = 0x4, fixed_abs, tag = 'smem constant byte address 0x4 - core index']
  #allocation1 [shape = 'u32[144,128]{1,0:T(1,128)}', space=vmem, size = 0x12000, scoped, tag = 'internal scratch']
  %s0 = inlined_call_operand.hbm [shape: f32[2,8,8,64], index: 0, kind: input, shape index: {}]
  %s1 = inlined_call_operand.hbm [shape: bf16[64,256], index: 1, kind: input, shape index: {}]
  %s2 = inlined_call_operand.hbm [shape: f32[1,256], index: 2, kind: input, shape index: {}]
  %s3 = inlined_call_operand.hbm [shape: f32[1,256], index: 3, kind: input, shape index: {}]
  %s4 = inlined_call_operand.hbm [shape: f32[9,256], index: 4, kind: input, shape index: {}]
  %s5 = inlined_call_operand.hbm [shape: f32[1,256], index: 5, kind: input, shape index: {}]
  %s6 = inlined_call_operand.hbm [shape: f32[1,256], index: 6, kind: input, shape index: {}]
  %s7 = inlined_call_operand.hbm [shape: bf16[256,64], index: 7, kind: input, shape index: {}]
  %s8 = inlined_call_operand.hbm [shape: f32[1,64], index: 8, kind: input, shape index: {}]
  %s9 = inlined_call_operand.hbm [shape: f32[1,64], index: 9, kind: input, shape index: {}]
  %s10 = inlined_call_operand.hbm [shape: bf16[64,4], index: 10, kind: input, shape index: {}]
  %s11 = inlined_call_operand.hbm [shape: bf16[4,64], index: 11, kind: input, shape index: {}]
  %s12 = inlined_call_operand.hbm [shape: f32[2,8,8,64], index: 12, kind: output, shape index: {}]
  %s13 = sld [smem:[#allocation0]]
  $region106: #{tpu_custom_call.1} parent=0
    _
  %s15 = ssub.s32 1, %s13
  %s16 = scalar_select 0, %s15, %s13
  $region1: #{tpu_custom_call.1} parent=0
    #allocation2 [shape = 'u8[65536]{0}', space=vmem, size = 0x10000, scoped, tag = 'input window, operand 0, single buffered']
    #allocation3 [shape = 's32[1]{0}', space=sflag, size = 0x4, scoped, tag = 'scoped memory for tpu_custom_call.1']
    #allocation4 [shape = 's32[1]{0}', space=sflag, size = 0x4, scoped, tag = 'scoped memory for tpu_custom_call.1']
    #allocation5 [shape = 'u8[32768]{0}', space=vmem, size = 0x8000, scoped, tag = 'input window, operand 1, single buffered']
    #allocation6 [shape = 's32[1]{0}', space=sflag, size = 0x4, scoped, tag = 'scoped memory for tpu_custom_call.1']
    #allocation7 [shape = 'u8[1024]{0}', space=vmem, size = 0x400, scoped, tag = 'input window, operand 2, single buffered']
    #allocation8 [shape = 'u8[1024]{0}', space=vmem, size = 0x400, scoped, tag = 'input window, operand 3, single buffered']
    #allocation9 [shape = 's32[1]{0}', space=sflag, size = 0x4, scoped, tag = 'scoped memory for tpu_custom_call.1']
    #allocation10 [shape = 'u8[16384]{0}', space=vmem, size = 0x4000, scoped, tag = 'input window, operand 4, single buffered']
    #allocation11 [shape = 'u8[1024]{0}', space=vmem, size = 0x400, scoped, tag = 'input window, operand 5, single buffered']
    #allocation12 [shape = 's32[1]{0}', space=sflag, size = 0x4, scoped, tag = 'scoped memory for tpu_custom_call.1']
    #allocation13 [shape = 'u8[1024]{0}', space=vmem, size = 0x400, scoped, tag = 'input window, operand 6, single buffered']
    #allocation14 [shape = 'u8[65536]{0}', space=vmem, size = 0x10000, scoped, tag = 'input window, operand 7, single buffered']
    #allocation15 [shape = 's32[1]{0}', space=sflag, size = 0x4, scoped, tag = 'scoped memory for tpu_custom_call.1']
    #allocation16 [shape = 'u8[512]{0}', space=vmem, size = 0x400, scoped, tag = 'input window, operand 8, single buffered']
    #allocation17 [shape = 'u8[512]{0}', space=vmem, size = 0x400, scoped, tag = 'input window, operand 9, single buffered']
    #allocation18 [shape = 's32[1]{0}', space=sflag, size = 0x4, scoped, tag = 'scoped memory for tpu_custom_call.1']
    #allocation19 [shape = 'u8[16384]{0}', space=vmem, size = 0x4000, scoped, tag = 'input window, operand 10, single buffered']
    #allocation20 [shape = 'u8[1024]{0}', space=vmem, size = 0x400, scoped, tag = 'input window, operand 11, single buffered']
    #allocation21 [shape = 's32[1]{0}', space=sflag, size = 0x4, scoped, tag = 'scoped memory for tpu_custom_call.1']
    #allocation22 [shape = 'u8[65536]{0}', space=vmem, size = 0x10000, scoped, tag = 'output window, operand 0, single buffered']
    %17 = vsyncpa [#allocation3], 0
    %18 = vsyncpa [#allocation6], 0
    %19 = vsyncpa [#allocation9], 0
    %20 = vsyncpa [#allocation12], 0
    %21 = vsyncpa [#allocation15], 0
    %22 = vsyncpa [#allocation18], 0
    %23 = vsyncpa [#allocation21], 0
    %24 = vsyncpa [#allocation4], 0
    // Predicated region
    $region2: #{tpu_custom_call.1} parent=1 // pred_check
      _
    $region3: #{tpu_custom_call.1} parent=1 // pred_check_branch
      %26 = sbr.rel (0) target = $region5
    $region4: #{tpu_custom_call.1} parent=1 // pred_region
      %s28 = ssub.s32 2048, 2048
      %29 = vsyncadd [#allocation3], %s28
      %s30 = sshll.u32 [#allocation2], 4
      %s31 = int_to_ptr.vmem [resolvable:$true] %s30
      %36 = dma.hbm_to_vmem [thread:$0]  %s0, 2048, %s31, [#allocation3], 128, 128, 8
    $region5: #{tpu_custom_call.1} parent=1 // pred_fallthru
      _
    // Predicated region
    $region6: #{tpu_custom_call.1} parent=1 // pred_check
      _
    $region7: #{tpu_custom_call.1} parent=1 // pred_check_branch
      %38 = sbr.rel (0) target = $region9
    $region8: #{tpu_custom_call.1} parent=1 // pred_region
      %s40 = ssub.s32 1024, 1024
      %41 = vsyncadd [#allocation6], %s40
      %s42 = sshll.u32 [#allocation5], 4
      %s43 = int_to_ptr.vmem [resolvable:$true] %s42
      %48 = dma.hbm_to_vmem [thread:$0]  %s1, 1024, %s43, [#allocation6], 128, 128, 8
    $region9: #{tpu_custom_call.1} parent=1 // pred_fallthru
      _
    // Predicated region
    $region10: #{tpu_custom_call.1} parent=1 // pred_check
      _
    $region11: #{tpu_custom_call.1} parent=1 // pred_check_branch
      %50 = sbr.rel (0) target = $region13
    $region12: #{tpu_custom_call.1} parent=1 // pred_region
      %s52 = ssub.s32 32, 32
      %53 = vsyncadd [#allocation6], %s52
      %s55 = sshll.u32 [#allocation7], 4
      %s56 = int_to_ptr.vmem [resolvable:$true] %s55
      %58 = dma.hbm_to_vmem [thread:$0]  %s2, 32, %s56, [#allocation6]
    $region13: #{tpu_custom_call.1} parent=1 // pred_fallthru
      _
    // Predicated region
    $region14: #{tpu_custom_call.1} parent=1 // pred_check
      _
    $region15: #{tpu_custom_call.1} parent=1 // pred_check_branch
      %60 = sbr.rel (0) target = $region17
    $region16: #{tpu_custom_call.1} parent=1 // pred_region
      %s62 = ssub.s32 32, 32
      %63 = vsyncadd [#allocation9], %s62
      %s65 = sshll.u32 [#allocation8], 4
      %s66 = int_to_ptr.vmem [resolvable:$true] %s65
      %68 = dma.hbm_to_vmem [thread:$0]  %s3, 32, %s66, [#allocation9]
    $region17: #{tpu_custom_call.1} parent=1 // pred_fallthru
      _
    // Predicated region
    $region18: #{tpu_custom_call.1} parent=1 // pred_check
      _
    $region19: #{tpu_custom_call.1} parent=1 // pred_check_branch
      %70 = sbr.rel (0) target = $region21
    $region20: #{tpu_custom_call.1} parent=1 // pred_region
      %s72 = ssub.s32 512, 512
      %73 = vsyncadd [#allocation9], %s72
      %s74 = sshll.u32 [#allocation10], 4
      %s75 = int_to_ptr.vmem [resolvable:$true] %s74
      %80 = dma.hbm_to_vmem [thread:$0]  %s4, 512, %s75, [#allocation9], 256, 256, 16
    $region21: #{tpu_custom_call.1} parent=1 // pred_fallthru
      _
    // Predicated region
    $region22: #{tpu_custom_call.1} parent=1 // pred_check
      _
    $region23: #{tpu_custom_call.1} parent=1 // pred_check_branch
      %82 = sbr.rel (0) target = $region25
    $region24: #{tpu_custom_call.1} parent=1 // pred_region
      %s84 = ssub.s32 32, 32
      %85 = vsyncadd [#allocation12], %s84
      %s87 = sshll.u32 [#allocation11], 4
      %s88 = int_to_ptr.vmem [resolvable:$true] %s87
      %90 = dma.hbm_to_vmem [thread:$0]  %s5, 32, %s88, [#allocation12]
    $region25: #{tpu_custom_call.1} parent=1 // pred_fallthru
      _
    // Predicated region
    $region26: #{tpu_custom_call.1} parent=1 // pred_check
      _
    $region27: #{tpu_custom_call.1} parent=1 // pred_check_branch
      %92 = sbr.rel (0) target = $region29
    $region28: #{tpu_custom_call.1} parent=1 // pred_region
      %s94 = ssub.s32 32, 32
      %95 = vsyncadd [#allocation12], %s94
      %s97 = sshll.u32 [#allocation13], 4
      %s98 = int_to_ptr.vmem [resolvable:$true] %s97
      %100 = dma.hbm_to_vmem [thread:$0]  %s6, 32, %s98, [#allocation12]
    $region29: #{tpu_custom_call.1} parent=1 // pred_fallthru
      _
    // Predicated region
    $region30: #{tpu_custom_call.1} parent=1 // pred_check
      _
    $region31: #{tpu_custom_call.1} parent=1 // pred_check_branch
      %102 = sbr.rel (0) target = $region33
    $region32: #{tpu_custom_call.1} parent=1 // pred_region
      %s104 = ssub.s32 2048, 2048
      %105 = vsyncadd [#allocation15], %s104
      %s106 = sshll.u32 [#allocation14], 4
      %s107 = int_to_ptr.vmem [resolvable:$true] %s106
      %112 = dma.hbm_to_vmem [thread:$0]  %s7, 2048, %s107, [#allocation15], 64, 64, 4
    $region33: #{tpu_custom_call.1} parent=1 // pred_fallthru
      _
    // Predicated region
    $region34: #{tpu_custom_call.1} parent=1 // pred_check
      _
    $region35: #{tpu_custom_call.1} parent=1 // pred_check_branch
      %114 = sbr.rel (0) target = $region37
    $region36: #{tpu_custom_call.1} parent=1 // pred_region
      %s116 = ssub.s32 16, 16
      %117 = vsyncadd [#allocation15], %s116
      %s119 = sshll.u32 [#allocation16], 4
      %s120 = int_to_ptr.vmem [resolvable:$true] %s119
      %122 = dma.hbm_to_vmem [thread:$0]  %s8, 16, %s120, [#allocation15]
    $region37: #{tpu_custom_call.1} parent=1 // pred_fallthru
      _
    // Predicated region
    $region38: #{tpu_custom_call.1} parent=1 // pred_check
      _
    $region39: #{tpu_custom_call.1} parent=1 // pred_check_branch
      %124 = sbr.rel (0) target = $region41
    $region40: #{tpu_custom_call.1} parent=1 // pred_region
      %s126 = ssub.s32 16, 16
      %127 = vsyncadd [#allocation18], %s126
      %s129 = sshll.u32 [#allocation17], 4
      %s130 = int_to_ptr.vmem [resolvable:$true] %s129
      %132 = dma.hbm_to_vmem [thread:$0]  %s9, 16, %s130, [#allocation18]
    $region41: #{tpu_custom_call.1} parent=1 // pred_fallthru
      _
    // Predicated region
    $region42: #{tpu_custom_call.1} parent=1 // pred_check
      _
    $region43: #{tpu_custom_call.1} parent=1 // pred_check_branch
      %134 = sbr.rel (0) target = $region45
    $region44: #{tpu_custom_call.1} parent=1 // pred_region
      %s136 = ssub.s32 512, 512
      %137 = vsyncadd [#allocation18], %s136
      %s138 = sshll.u32 [#allocation19], 4
      %s139 = int_to_ptr.vmem [resolvable:$true] %s138
      %144 = dma.hbm_to_vmem [thread:$0]  %s10, 512, %s139, [#allocation18], 64, 64, 4
    $region45: #{tpu_custom_call.1} parent=1 // pred_fallthru
      _
    // Predicated region
    $region46: #{tpu_custom_call.1} parent=1 // pred_check
      _
    $region47: #{tpu_custom_call.1} parent=1 // pred_check_branch
      %146 = sbr.rel (0) target = $region49
    $region48: #{tpu_custom_call.1} parent=1 // pred_region
      %s148 = ssub.s32 32, 32
      %149 = vsyncadd [#allocation21], %s148
      %s151 = sshll.u32 [#allocation20], 4
      %s152 = int_to_ptr.vmem [resolvable:$true] %s151
      %154 = dma.hbm_to_vmem [thread:$0]  %s11, 32, %s152, [#allocation21]
    $region49: #{tpu_custom_call.1} parent=1 // pred_fallthru
      _
    // Predicated region
    $region50: #{tpu_custom_call.1} parent=1 // pred_check
      _
    $region51: #{tpu_custom_call.1} parent=1 // pred_check_branch
      %156 = sbr.rel (0) target = $region53
    $region52: #{tpu_custom_call.1} parent=1 // pred_region
      %157 = dma.done [#allocation3], 2048
    $region53: #{tpu_custom_call.1} parent=1 // pred_fallthru
      _
    // Predicated region
    $region54: #{tpu_custom_call.1} parent=1 // pred_check
      _
    $region55: #{tpu_custom_call.1} parent=1 // pred_check_branch
      %159 = sbr.rel (0) target = $region57
    $region56: #{tpu_custom_call.1} parent=1 // pred_region
      %160 = dma.done [#allocation6], 1024
    $region57: #{tpu_custom_call.1} parent=1 // pred_fallthru
      _
    // Predicated region
    $region58: #{tpu_custom_call.1} parent=1 // pred_check
      _
    $region59: #{tpu_custom_call.1} parent=1 // pred_check_branch
      %162 = sbr.rel (0) target = $region61
    $region60: #{tpu_custom_call.1} parent=1 // pred_region
      %163 = dma.done [#allocation6], 32
    $region61: #{tpu_custom_call.1} parent=1 // pred_fallthru
      _
    // Predicated region
    $region62: #{tpu_custom_call.1} parent=1 // pred_check
      _
    $region63: #{tpu_custom_call.1} parent=1 // pred_check_branch
      %165 = sbr.rel (0) target = $region65
    $region64: #{tpu_custom_call.1} parent=1 // pred_region
      %166 = dma.done [#allocation9], 32
    $region65: #{tpu_custom_call.1} parent=1 // pred_fallthru
      _
    // Predicated region
    $region66: #{tpu_custom_call.1} parent=1 // pred_check
      _
    $region67: #{tpu_custom_call.1} parent=1 // pred_check_branch
      %168 = sbr.rel (0) target = $region69
    $region68: #{tpu_custom_call.1} parent=1 // pred_region
      %169 = dma.done [#allocation9], 512
    $region69: #{tpu_custom_call.1} parent=1 // pred_fallthru
      _
    // Predicated region
    $region70: #{tpu_custom_call.1} parent=1 // pred_check
      _
    $region71: #{tpu_custom_call.1} parent=1 // pred_check_branch
      %171 = sbr.rel (0) target = $region73
    $region72: #{tpu_custom_call.1} parent=1 // pred_region
      %172 = dma.done [#allocation12], 32
    $region73: #{tpu_custom_call.1} parent=1 // pred_fallthru
      _
    // Predicated region
    $region74: #{tpu_custom_call.1} parent=1 // pred_check
      _
    $region75: #{tpu_custom_call.1} parent=1 // pred_check_branch
      %174 = sbr.rel (0) target = $region77
    $region76: #{tpu_custom_call.1} parent=1 // pred_region
      %175 = dma.done [#allocation12], 32
    $region77: #{tpu_custom_call.1} parent=1 // pred_fallthru
      _
    // Predicated region
    $region78: #{tpu_custom_call.1} parent=1 // pred_check
      _
    $region79: #{tpu_custom_call.1} parent=1 // pred_check_branch
      %177 = sbr.rel (0) target = $region81
    $region80: #{tpu_custom_call.1} parent=1 // pred_region
      %178 = dma.done [#allocation15], 2048
    $region81: #{tpu_custom_call.1} parent=1 // pred_fallthru
      _
    // Predicated region
    $region82: #{tpu_custom_call.1} parent=1 // pred_check
      _
    $region83: #{tpu_custom_call.1} parent=1 // pred_check_branch
      %180 = sbr.rel (0) target = $region85
    $region84: #{tpu_custom_call.1} parent=1 // pred_region
      %181 = dma.done [#allocation15], 16
    $region85: #{tpu_custom_call.1} parent=1 // pred_fallthru
      _
    // Predicated region
    $region86: #{tpu_custom_call.1} parent=1 // pred_check
      _
    $region87: #{tpu_custom_call.1} parent=1 // pred_check_branch
      %183 = sbr.rel (0) target = $region89
    $region88: #{tpu_custom_call.1} parent=1 // pred_region
      %184 = dma.done [#allocation18], 16
    $region89: #{tpu_custom_call.1} parent=1 // pred_fallthru
      _
    // Predicated region
    $region90: #{tpu_custom_call.1} parent=1 // pred_check
      _
    $region91: #{tpu_custom_call.1} parent=1 // pred_check_branch
      %186 = sbr.rel (0) target = $region93
    $region92: #{tpu_custom_call.1} parent=1 // pred_region
      %187 = dma.done [#allocation18], 512
    $region93: #{tpu_custom_call.1} parent=1 // pred_fallthru
      _
    // Predicated region
    $region94: #{tpu_custom_call.1} parent=1 // pred_check
      _
    $region95: #{tpu_custom_call.1} parent=1 // pred_check_branch
      %189 = sbr.rel (0) target = $region97
    $region96: #{tpu_custom_call.1} parent=1 // pred_region
      %190 = dma.done [#allocation21], 32
    $region97: #{tpu_custom_call.1} parent=1 // pred_fallthru
      _
    %v192 = vld [vmem:[#allocation2] sm:$0xff]
    %v193 = vld [vmem:[#allocation2 + $0x8] sm:$0xff]
    %v194 = vld [vmem:[#allocation2 + $0x10] sm:$0xff]
    %v195 = vld [vmem:[#allocation2 + $0x18] sm:$0xff]
    %v196 = vld [vmem:[#allocation2 + $0x20] sm:$0xff]
    %v197 = vld [vmem:[#allocation2 + $0x28] sm:$0xff]
    %v198 = vld [vmem:[#allocation2 + $0x30] sm:$0xff]
    %v199 = vld [vmem:[#allocation2 + $0x38] sm:$0xff]
    %v200 = vld [vmem:[#allocation2 + $0x40] sm:$0xff]
    %v201 = vld [vmem:[#allocation2 + $0x48] sm:$0xff]
    %v202 = vld [vmem:[#allocation2 + $0x50] sm:$0xff]
    %v203 = vld [vmem:[#allocation2 + $0x58] sm:$0xff]
    %v204 = vld [vmem:[#allocation2 + $0x60] sm:$0xff]
    %v205 = vld [vmem:[#allocation2 + $0x68] sm:$0xff]
    %v206 = vld [vmem:[#allocation2 + $0x70] sm:$0xff]
    %v207 = vld [vmem:[#allocation2 + $0x78] sm:$0xff]
    %v208 = vpack.c.bf16 %v193, %v192
    %v209 = vpack.c.bf16 %v195, %v194
    %v210 = vpack.c.bf16 %v197, %v196
    %v211 = vpack.c.bf16 %v199, %v198
    %v212 = vpack.c.bf16 %v201, %v200
    %v213 = vpack.c.bf16 %v203, %v202
    %v214 = vpack.c.bf16 %v205, %v204
    %v215 = vpack.c.bf16 %v207, %v206
    %v216 = vld [vmem:[#allocation5] sm:$0xff]
    %v217 = vld [vmem:[#allocation5 + $0x8] sm:$0xff]
    %v218 = vld [vmem:[#allocation5 + $0x10] sm:$0xff]
    %v219 = vld [vmem:[#allocation5 + $0x18] sm:$0xff]
    %v220 = vld [vmem:[#allocation5 + $0x20] sm:$0xff]
    %v221 = vld [vmem:[#allocation5 + $0x28] sm:$0xff]
    %v222 = vld [vmem:[#allocation5 + $0x30] sm:$0xff]
    %v223 = vld [vmem:[#allocation5 + $0x38] sm:$0xff]
    %v232 = vunpack.c.l.b16 %v216
    %v233 = vunpack.c.h.b16 %v216
    %v234 = vunpack.c.l.b16 %v217
    %v235 = vunpack.c.h.b16 %v217
    %v236 = vunpack.c.l.b16 %v218
    %v237 = vunpack.c.h.b16 %v218
    %v238 = vunpack.c.l.b16 %v219
    %v239 = vunpack.c.h.b16 %v219
    %v240 = vunpack.c.l.b16 %v220
    %v241 = vunpack.c.h.b16 %v220
    %v242 = vunpack.c.l.b16 %v221
    %v243 = vunpack.c.h.b16 %v221
    %v244 = vunpack.c.l.b16 %v222
    %v245 = vunpack.c.h.b16 %v222
    %v246 = vunpack.c.l.b16 %v223
    %v247 = vunpack.c.h.b16 %v223
    %v248 = vpack.c.b16 %v234, %v232
    %v249 = vpack.c.b16 %v235, %v233
    %v250 = vpack.c.b16 %v238, %v236
    %v251 = vpack.c.b16 %v239, %v237
    %v252 = vpack.c.b16 %v242, %v240
    %v253 = vpack.c.b16 %v243, %v241
    %v254 = vpack.c.b16 %v246, %v244
    %v255 = vpack.c.b16 %v247, %v245
    %vm264 = vcmask 523264
    %v266 = vsel %vm264, %v208, 0
    %v269 = vsel %vm264, %v209, 0
    %v272 = vsel %vm264, %v210, 0
    %v275 = vsel %vm264, %v211, 0
    %v278 = vsel %vm264, %v212, 0
    %v281 = vsel %vm264, %v213, 0
    %v284 = vsel %vm264, %v214, 0
    %v287 = vsel %vm264, %v215, 0
    %289 = vmatprep.subr.bf16.mxu0 %v249
    %290 = vmatpush1.bf16.msra.mxu0 %v248
    %291 = vmatprep.subr.bf16.mxu0 %v251
    %292 = vmatpush1.bf16.msra.mxu0 %v250
    %293 = vmatprep.subr.bf16.mxu0 %v253
    %294 = vmatpush1.bf16.msra.mxu0 %v252
    %295 = vmatprep.subr.bf16.mxu0 %v255
    %296 = vmatpush1.bf16.msra.mxu0 %v254
    %297 = vmatprep.subr.bf16.mxu0 0
    %298 = vmatpush1.bf16.msra.mxu0 0
    %299 = vmatprep.subr.bf16.mxu0 0
    %300 = vmatpush1.bf16.msra.mxu0 0
    %301 = vmatprep.subr.bf16.mxu0 0
    %302 = vmatpush1.bf16.msra.mxu0 0
    %303 = vmatprep.subr.bf16.mxu0 0
    %304 = vmatpush1.bf16.msra.mxu0 0
    %305 = vmatprep.subr.bf16.mxu0 0
    %306 = vmatpush1.bf16.msra.mxu0 0
    %307 = vmatprep.subr.bf16.mxu0 0
    %308 = vmatpush1.bf16.msra.mxu0 0
    %309 = vmatprep.subr.bf16.mxu0 0
    %310 = vmatpush1.bf16.msra.mxu0 0
    %311 = vmatprep.subr.bf16.mxu0 0
    %312 = vmatpush1.bf16.msra.mxu0 0
    %313 = vmatprep.subr.bf16.mxu0 0
    %314 = vmatpush1.bf16.msra.mxu0 0
    %315 = vmatprep.subr.bf16.mxu0 0
    %316 = vmatpush1.bf16.msra.mxu0 0
    %317 = vmatprep.subr.bf16.mxu0 0
    %318 = vmatpush1.bf16.msra.mxu0 0
    %319 = vmatprep.subr.bf16.mxu0 0
    %320 = vmatpush1.bf16.msra.mxu0 0
    %321 = vmatprep.mubr.bf16.mxu0 0
    %322 = vmatmul.mubr.bf16.gmra.mrb[0].mxu0 %v266
    %v323 = vpop.f32.mrb[0].mxu0
    %v324 = vadd.f32 0.0, %v323
    %v325 = vpop.f32.mrb[0].mxu0
    %v326 = vadd.f32 0.0, %v325
    %v327 = vpop.f32.mrb[0].mxu0
    %v328 = vadd.f32 0.0, %v327
    %v329 = vpop.f32.mrb[0].mxu0
    %v330 = vadd.f32 0.0, %v329
    %331 = vmatprep.mubr.bf16.mxu0 0
    %332 = vmatmul.mubr.bf16.gmra.mrb[0].mxu0 %v269
    %v333 = vpop.f32.mrb[0].mxu0
    %v334 = vadd.f32 0.0, %v333
    %v335 = vpop.f32.mrb[0].mxu0
    %v336 = vadd.f32 0.0, %v335
    %v337 = vpop.f32.mrb[0].mxu0
    %v338 = vadd.f32 0.0, %v337
    %v339 = vpop.f32.mrb[0].mxu0
    %v340 = vadd.f32 0.0, %v339
    %341 = vmatprep.mubr.bf16.mxu0 0
    %342 = vmatmul.mubr.bf16.gmra.mrb[0].mxu0 %v272
    %v343 = vpop.f32.mrb[0].mxu0
    %v344 = vadd.f32 0.0, %v343
    %v345 = vpop.f32.mrb[0].mxu0
    %v346 = vadd.f32 0.0, %v345
    %v347 = vpop.f32.mrb[0].mxu0
    %v348 = vadd.f32 0.0, %v347
    %v349 = vpop.f32.mrb[0].mxu0
    %v350 = vadd.f32 0.0, %v349
    %351 = vmatprep.mubr.bf16.mxu0 0
    %352 = vmatmul.mubr.bf16.gmra.mrb[0].mxu0 %v275
    %v353 = vpop.f32.mrb[0].mxu0
    %v354 = vadd.f32 0.0, %v353
    %v355 = vpop.f32.mrb[0].mxu0
    %v356 = vadd.f32 0.0, %v355
    %v357 = vpop.f32.mrb[0].mxu0
    %v358 = vadd.f32 0.0, %v357
    %v359 = vpop.f32.mrb[0].mxu0
    %v360 = vadd.f32 0.0, %v359
    %361 = vmatprep.mubr.bf16.mxu0 0
    %362 = vmatmul.mubr.bf16.gmra.mrb[0].mxu0 %v278
    %v363 = vpop.f32.mrb[0].mxu0
    %v364 = vadd.f32 0.0, %v363
    %v365 = vpop.f32.mrb[0].mxu0
    %v366 = vadd.f32 0.0, %v365
    %v367 = vpop.f32.mrb[0].mxu0
    %v368 = vadd.f32 0.0, %v367
    %v369 = vpop.f32.mrb[0].mxu0
    %v370 = vadd.f32 0.0, %v369
    %371 = vmatprep.mubr.bf16.mxu0 0
    %372 = vmatmul.mubr.bf16.gmra.mrb[0].mxu0 %v281
    %v373 = vpop.f32.mrb[0].mxu0
    %v374 = vadd.f32 0.0, %v373
    %v375 = vpop.f32.mrb[0].mxu0
    %v376 = vadd.f32 0.0, %v375
    %v377 = vpop.f32.mrb[0].mxu0
    %v378 = vadd.f32 0.0, %v377
    %v379 = vpop.f32.mrb[0].mxu0
    %v380 = vadd.f32 0.0, %v379
    %381 = vmatprep.mubr.bf16.mxu0 0
    %382 = vmatmul.mubr.bf16.gmra.mrb[0].mxu0 %v284
    %v383 = vpop.f32.mrb[0].mxu0
    %v384 = vadd.f32 0.0, %v383
    %v385 = vpop.f32.mrb[0].mxu0
    %v386 = vadd.f32 0.0, %v385
    %v387 = vpop.f32.mrb[0].mxu0
    %v388 = vadd.f32 0.0, %v387
    %v389 = vpop.f32.mrb[0].mxu0
    %v390 = vadd.f32 0.0, %v389
    %391 = vmatprep.mubr.bf16.mxu0 0
    %392 = vmatmul.mubr.bf16.gmra.mrb[0].mxu0 %v287
    %v393 = vpop.f32.mrb[0].mxu0
    %v394 = vadd.f32 0.0, %v393
    %v395 = vpop.f32.mrb[0].mxu0
    %v396 = vadd.f32 0.0, %v395
    %v397 = vpop.f32.mrb[0].mxu0
    %v398 = vadd.f32 0.0, %v397
    %v399 = vpop.f32.mrb[0].mxu0
    %v400 = vadd.f32 0.0, %v399
    %401 = vdwg.mxu0
    %v402 = vld [vmem:[#allocation7] sm:$0x3]
    %v403 = vld [vmem:[#allocation8] sm:$0x3]
    %v404 = vadd.f32 %v324, %v328
    %v405 = vadd.f32 %v404, %v334
    %v406 = vadd.f32 %v405, %v338
    %v407 = vadd.f32 %v406, %v344
    %v408 = vadd.f32 %v407, %v348
    %v409 = vadd.f32 %v408, %v354
    %v410 = vadd.f32 %v409, %v358
    %v411 = vadd.f32 %v410, %v364
    %v412 = vadd.f32 %v411, %v368
    %v413 = vadd.f32 %v412, %v374
    %v414 = vadd.f32 %v413, %v378
    %v415 = vadd.f32 %v414, %v384
    %v416 = vadd.f32 %v415, %v388
    %v417 = vadd.f32 %v416, %v394
    %v418 = vadd.f32 %v417, %v398
    %v419 = vrot.slane %v418, 4
    %v420 = vadd.f32 %v418, %v419
    %v421 = vrot.slane %v420, 2
    %v422 = vadd.f32 %v420, %v421
    %v423 = vrot.slane %v422, 1
    %v424 = vadd.f32 %v422, %v423
    %v425 = vadd.f32 %v326, %v330
    %v426 = vadd.f32 %v425, %v336
    %v427 = vadd.f32 %v426, %v340
    %v428 = vadd.f32 %v427, %v346
    %v429 = vadd.f32 %v428, %v350
    %v430 = vadd.f32 %v429, %v356
    %v431 = vadd.f32 %v430, %v360
    %v432 = vadd.f32 %v431, %v366
    %v433 = vadd.f32 %v432, %v370
    %v434 = vadd.f32 %v433, %v376
    %v435 = vadd.f32 %v434, %v380
    %v436 = vadd.f32 %v435, %v386
    %v437 = vadd.f32 %v436, %v390
    %v438 = vadd.f32 %v437, %v396
    %v439 = vadd.f32 %v438, %v400
    %v440 = vrot.slane %v439, 4
    %v441 = vadd.f32 %v439, %v440
    %v442 = vrot.slane %v441, 2
    %v443 = vadd.f32 %v441, %v442
    %v444 = vrot.slane %v443, 1
    %v445 = vadd.f32 %v443, %v444
    %v446 = vrcp.pop 128.0
    %v447 = vmul.f32 %v424, %v446
    %v448 = vmul.f32 %v445, %v446
    %v449 = vsub.f32 %v324, %v447
    %v450 = vsub.f32 %v326, %v448
    %v451 = vsub.f32 %v328, %v447
    %v452 = vsub.f32 %v330, %v448
    %v453 = vsub.f32 %v334, %v447
    %v454 = vsub.f32 %v336, %v448
    %v455 = vsub.f32 %v338, %v447
    %v456 = vsub.f32 %v340, %v448
    %v457 = vsub.f32 %v344, %v447
    %v458 = vsub.f32 %v346, %v448
    %v459 = vsub.f32 %v348, %v447
    %v460 = vsub.f32 %v350, %v448
    %v461 = vsub.f32 %v354, %v447
    %v462 = vsub.f32 %v356, %v448
    %v463 = vsub.f32 %v358, %v447
    %v464 = vsub.f32 %v360, %v448
    %v465 = vsub.f32 %v364, %v447
    %v466 = vsub.f32 %v366, %v448
    %v467 = vsub.f32 %v368, %v447
    %v468 = vsub.f32 %v370, %v448
    %v469 = vsub.f32 %v374, %v447
    %v470 = vsub.f32 %v376, %v448
    %v471 = vsub.f32 %v378, %v447
    %v472 = vsub.f32 %v380, %v448
    %v473 = vsub.f32 %v384, %v447
    %v474 = vsub.f32 %v386, %v448
    %v475 = vsub.f32 %v388, %v447
    %v476 = vsub.f32 %v390, %v448
    %v477 = vsub.f32 %v394, %v447
    %v478 = vsub.f32 %v396, %v448
    %v479 = vsub.f32 %v398, %v447
    %v480 = vsub.f32 %v400, %v448
    %v481 = vmul.f32 %v449, %v449
    %v482 = vmul.f32 %v450, %v450
    %v483 = vmul.f32 %v451, %v451
    %v484 = vmul.f32 %v452, %v452
    %v485 = vmul.f32 %v453, %v453
    %v486 = vmul.f32 %v454, %v454
    %v487 = vmul.f32 %v455, %v455
    %v488 = vmul.f32 %v456, %v456
    %v489 = vmul.f32 %v457, %v457
    %v490 = vmul.f32 %v458, %v458
    %v491 = vmul.f32 %v459, %v459
    %v492 = vmul.f32 %v460, %v460
    %v493 = vmul.f32 %v461, %v461
    %v494 = vmul.f32 %v462, %v462
    %v495 = vmul.f32 %v463, %v463
    %v496 = vmul.f32 %v464, %v464
    %v497 = vmul.f32 %v465, %v465
    %v498 = vmul.f32 %v466, %v466
    %v499 = vmul.f32 %v467, %v467
    %v500 = vmul.f32 %v468, %v468
    %v501 = vmul.f32 %v469, %v469
    %v502 = vmul.f32 %v470, %v470
    %v503 = vmul.f32 %v471, %v471
    %v504 = vmul.f32 %v472, %v472
    %v505 = vmul.f32 %v473, %v473
    %v506 = vmul.f32 %v474, %v474
    %v507 = vmul.f32 %v475, %v475
    %v508 = vmul.f32 %v476, %v476
    %v509 = vmul.f32 %v477, %v477
    %v510 = vmul.f32 %v478, %v478
    %v511 = vmul.f32 %v479, %v479
    %v512 = vmul.f32 %v480, %v480
    %v513 = vadd.f32 %v481, %v483
    %v514 = vadd.f32 %v513, %v485
    %v515 = vadd.f32 %v514, %v487
    %v516 = vadd.f32 %v515, %v489
    %v517 = vadd.f32 %v516, %v491
    %v518 = vadd.f32 %v517, %v493
    %v519 = vadd.f32 %v518, %v495
    %v520 = vadd.f32 %v519, %v497
    %v521 = vadd.f32 %v520, %v499
    %v522 = vadd.f32 %v521, %v501
    %v523 = vadd.f32 %v522, %v503
    %v524 = vadd.f32 %v523, %v505
    %v525 = vadd.f32 %v524, %v507
    %v526 = vadd.f32 %v525, %v509
    %v527 = vadd.f32 %v526, %v511
    %v528 = vrot.slane %v527, 4
    %v529 = vadd.f32 %v527, %v528
    %v530 = vrot.slane %v529, 2
    %v531 = vadd.f32 %v529, %v530
    %v532 = vrot.slane %v531, 1
    %v533 = vadd.f32 %v531, %v532
    %v534 = vadd.f32 %v482, %v484
    %v535 = vadd.f32 %v534, %v486
    %v536 = vadd.f32 %v535, %v488
    %v537 = vadd.f32 %v536, %v490
    %v538 = vadd.f32 %v537, %v492
    %v539 = vadd.f32 %v538, %v494
    %v540 = vadd.f32 %v539, %v496
    %v541 = vadd.f32 %v540, %v498
    %v542 = vadd.f32 %v541, %v500
    %v543 = vadd.f32 %v542, %v502
    %v544 = vadd.f32 %v543, %v504
    %v545 = vadd.f32 %v544, %v506
    %v546 = vadd.f32 %v545, %v508
    %v547 = vadd.f32 %v546, %v510
    %v548 = vadd.f32 %v547, %v512
    %v549 = vrot.slane %v548, 4
    %v550 = vadd.f32 %v548, %v549
    %v551 = vrot.slane %v550, 2
    %v552 = vadd.f32 %v550, %v551
    %v553 = vrot.slane %v552, 1
    %v554 = vadd.f32 %v552, %v553
    %v555 = vmul.f32 %v533, %v446
    %v556 = vmul.f32 %v554, %v446
    %v557 = vadd.f32 %v555, 1e-05
    %v558 = vadd.f32 %v556, 1e-05
    %v559 = vrsqrt.pop %v557
    %v560 = vrsqrt.pop %v558
    %v563 = vcombine.low %v559, %v560
    %v565 = vunpack.c.l.s4 1966171168
    %v566 = vunpack.c.0.s8 %v565
    %v567 = vlaneseq
    %v568 = vshrl.u32 %v567, 7
    %v569 = vsub.s32 %v566, %v568
    %v570 = vrot.slane %v563, %v569
    %v572 = vunpack.c.l.s4 1966171168
    %v573 = vunpack.c.0.s8 %v572
    %v574 = vlaneseq
    %v575 = vshrl.u32 %v574, 7
    %v576 = vsub.s32 %v573, %v575
    %v577 = vrot.slane %v570, %v576
    %v579 = vmul.f32 %v402, %v577
    %v581 = vlaneseq
    %v582 = vshrl.u32 %v581, 7
    %v583 = vsub.s32 0, %v582
    %v584 = vrot.slane %v579, %v583
    %v585 = vlaneseq
    %v586 = vshrl.u32 %v585, 7
    %v587 = vsub.s32 1, %v586
    %v588 = vrot.slane %v579, %v587
    %v591 = vmul.f32 %v449, %v584
    %v592 = vmul.f32 %v450, %v588
    %v593 = vmul.f32 %v451, %v584
    %v594 = vmul.f32 %v452, %v588
    %v595 = vmul.f32 %v453, %v584
    %v596 = vmul.f32 %v454, %v588
    %v597 = vmul.f32 %v455, %v584
    %v598 = vmul.f32 %v456, %v588
    %v599 = vmul.f32 %v457, %v584
    %v600 = vmul.f32 %v458, %v588
    %v601 = vmul.f32 %v459, %v584
    %v602 = vmul.f32 %v460, %v588
    %v603 = vmul.f32 %v461, %v584
    %v604 = vmul.f32 %v462, %v588
    %v605 = vmul.f32 %v463, %v584
    %v606 = vmul.f32 %v464, %v588
    %v607 = vmul.f32 %v465, %v584
    %v608 = vmul.f32 %v466, %v588
    %v609 = vmul.f32 %v467, %v584
    %v610 = vmul.f32 %v468, %v588
    %v611 = vmul.f32 %v469, %v584
    %v612 = vmul.f32 %v470, %v588
    %v613 = vmul.f32 %v471, %v584
    %v614 = vmul.f32 %v472, %v588
    %v615 = vmul.f32 %v473, %v584
    %v616 = vmul.f32 %v474, %v588
    %v617 = vmul.f32 %v475, %v584
    %v618 = vmul.f32 %v476, %v588
    %v619 = vmul.f32 %v477, %v584
    %v620 = vmul.f32 %v478, %v588
    %v621 = vmul.f32 %v479, %v584
    %v622 = vmul.f32 %v480, %v588
    %v624 = vlaneseq
    %v625 = vshrl.u32 %v624, 7
    %v626 = vsub.s32 0, %v625
    %v627 = vrot.slane %v403, %v626
    %v628 = vlaneseq
    %v629 = vshrl.u32 %v628, 7
    %v630 = vsub.s32 1, %v629
    %v631 = vrot.slane %v403, %v630
    %v634 = vadd.f32 %v591, %v627
    %v635 = vadd.f32 %v592, %v631
    %v636 = vadd.f32 %v593, %v627
    %v637 = vadd.f32 %v594, %v631
    %v638 = vadd.f32 %v595, %v627
    %v639 = vadd.f32 %v596, %v631
    %v640 = vadd.f32 %v597, %v627
    %v641 = vadd.f32 %v598, %v631
    %v642 = vadd.f32 %v599, %v627
    %v643 = vadd.f32 %v600, %v631
    %v644 = vadd.f32 %v601, %v627
    %v645 = vadd.f32 %v602, %v631
    %v646 = vadd.f32 %v603, %v627
    %v647 = vadd.f32 %v604, %v631
    %v648 = vadd.f32 %v605, %v627
    %v649 = vadd.f32 %v606, %v631
    %v650 = vadd.f32 %v607, %v627
    %v651 = vadd.f32 %v608, %v631
    %v652 = vadd.f32 %v609, %v627
    %v653 = vadd.f32 %v610, %v631
    %v654 = vadd.f32 %v611, %v627
    %v655 = vadd.f32 %v612, %v631
    %v656 = vadd.f32 %v613, %v627
    %v657 = vadd.f32 %v614, %v631
    %v658 = vadd.f32 %v615, %v627
    %v659 = vadd.f32 %v616, %v631
    %v660 = vadd.f32 %v617, %v627
    %v661 = vadd.f32 %v618, %v631
    %v662 = vadd.f32 %v619, %v627
    %v663 = vadd.f32 %v620, %v631
    %v664 = vadd.f32 %v621, %v627
    %v665 = vadd.f32 %v622, %v631
    %v666 = vsub.f32 0.0, %v634
    %v667 = vsub.f32 0.0, %v635
    %v668 = vsub.f32 0.0, %v636
    %v669 = vsub.f32 0.0, %v637
    %v670 = vsub.f32 0.0, %v638
    %v671 = vsub.f32 0.0, %v639
    %v672 = vsub.f32 0.0, %v640
    %v673 = vsub.f32 0.0, %v641
    %v674 = vsub.f32 0.0, %v642
    %v675 = vsub.f32 0.0, %v643
    %v676 = vsub.f32 0.0, %v644
    %v677 = vsub.f32 0.0, %v645
    %v678 = vsub.f32 0.0, %v646
    %v679 = vsub.f32 0.0, %v647
    %v680 = vsub.f32 0.0, %v648
    %v681 = vsub.f32 0.0, %v649
    %v682 = vsub.f32 0.0, %v650
    %v683 = vsub.f32 0.0, %v651
    %v684 = vsub.f32 0.0, %v652
    %v685 = vsub.f32 0.0, %v653
    %v686 = vsub.f32 0.0, %v654
    %v687 = vsub.f32 0.0, %v655
    %v688 = vsub.f32 0.0, %v656
    %v689 = vsub.f32 0.0, %v657
    %v690 = vsub.f32 0.0, %v658
    %v691 = vsub.f32 0.0, %v659
    %v692 = vsub.f32 0.0, %v660
    %v693 = vsub.f32 0.0, %v661
    %v694 = vsub.f32 0.0, %v662
    %v695 = vsub.f32 0.0, %v663
    %v696 = vsub.f32 0.0, %v664
    %v697 = vsub.f32 0.0, %v665
    %v698 = vmul.f32 %v666, 1.442695
    %v699 = vpow.pop %v698
    %v700 = vmul.f32 %v667, 1.442695
    %v701 = vpow.pop %v700
    %v702 = vmul.f32 %v668, 1.442695
    %v703 = vpow.pop %v702
    %v704 = vmul.f32 %v669, 1.442695
    %v705 = vpow.pop %v704
    %v706 = vmul.f32 %v670, 1.442695
    %v707 = vpow.pop %v706
    %v708 = vmul.f32 %v671, 1.442695
    %v709 = vpow.pop %v708
    %v710 = vmul.f32 %v672, 1.442695
    %v711 = vpow.pop %v710
    %v712 = vmul.f32 %v673, 1.442695
    %v713 = vpow.pop %v712
    %v714 = vmul.f32 %v674, 1.442695
    %v715 = vpow.pop %v714
    %v716 = vmul.f32 %v675, 1.442695
    %v717 = vpow.pop %v716
    %v718 = vmul.f32 %v676, 1.442695
    %v719 = vpow.pop %v718
    %v720 = vmul.f32 %v677, 1.442695
    %v721 = vpow.pop %v720
    %v722 = vmul.f32 %v678, 1.442695
    %v723 = vpow.pop %v722
    %v724 = vmul.f32 %v679, 1.442695
    %v725 = vpow.pop %v724
    %v726 = vmul.f32 %v680, 1.442695
    %v727 = vpow.pop %v726
    %v728 = vmul.f32 %v681, 1.442695
    %v729 = vpow.pop %v728
    %v730 = vmul.f32 %v682, 1.442695
    %v731 = vpow.pop %v730
    %v732 = vmul.f32 %v683, 1.442695
    %v733 = vpow.pop %v732
    %v734 = vmul.f32 %v684, 1.442695
    %v735 = vpow.pop %v734
    %v736 = vmul.f32 %v685, 1.442695
    %v737 = vpow.pop %v736
    %v738 = vmul.f32 %v686, 1.442695
    %v739 = vpow.pop %v738
    %v740 = vmul.f32 %v687, 1.442695
    %v741 = vpow.pop %v740
    %v742 = vmul.f32 %v688, 1.442695
    %v743 = vpow.pop %v742
    %v744 = vmul.f32 %v689, 1.442695
    %v745 = vpow.pop %v744
    %v746 = vmul.f32 %v690, 1.442695
    %v747 = vpow.pop %v746
    %v748 = vmul.f32 %v691, 1.442695
    %v749 = vpow.pop %v748
    %v750 = vmul.f32 %v692, 1.442695
    %v751 = vpow.pop %v750
    %v752 = vmul.f32 %v693, 1.442695
    %v753 = vpow.pop %v752
    %v754 = vmul.f32 %v694, 1.442695
    %v755 = vpow.pop %v754
    %v756 = vmul.f32 %v695, 1.442695
    %v757 = vpow.pop %v756
    %v758 = vmul.f32 %v696, 1.442695
    %v759 = vpow.pop %v758
    %v760 = vmul.f32 %v697, 1.442695
    %v761 = vpow.pop %v760
    %v762 = vadd.f32 %v699, 1.0
    %v763 = vadd.f32 %v701, 1.0
    %v764 = vadd.f32 %v703, 1.0
    %v765 = vadd.f32 %v705, 1.0
    %v766 = vadd.f32 %v707, 1.0
    %v767 = vadd.f32 %v709, 1.0
    %v768 = vadd.f32 %v711, 1.0
    %v769 = vadd.f32 %v713, 1.0
    %v770 = vadd.f32 %v715, 1.0
    %v771 = vadd.f32 %v717, 1.0
    %v772 = vadd.f32 %v719, 1.0
    %v773 = vadd.f32 %v721, 1.0
    %v774 = vadd.f32 %v723, 1.0
    %v775 = vadd.f32 %v725, 1.0
    %v776 = vadd.f32 %v727, 1.0
    %v777 = vadd.f32 %v729, 1.0
    %v778 = vadd.f32 %v731, 1.0
    %v779 = vadd.f32 %v733, 1.0
    %v780 = vadd.f32 %v735, 1.0
    %v781 = vadd.f32 %v737, 1.0
    %v782 = vadd.f32 %v739, 1.0
    %v783 = vadd.f32 %v741, 1.0
    %v784 = vadd.f32 %v743, 1.0
    %v785 = vadd.f32 %v745, 1.0
    %v786 = vadd.f32 %v747, 1.0
    %v787 = vadd.f32 %v749, 1.0
    %v788 = vadd.f32 %v751, 1.0
    %v789 = vadd.f32 %v753, 1.0
    %v790 = vadd.f32 %v755, 1.0
    %v791 = vadd.f32 %v757, 1.0
    %v792 = vadd.f32 %v759, 1.0
    %v793 = vadd.f32 %v761, 1.0
    %v794 = vrcp.pop %v762
    %v795 = vrcp.pop %v763
    %v796 = vrcp.pop %v764
    %v797 = vrcp.pop %v765
    %v798 = vrcp.pop %v766
    %v799 = vrcp.pop %v767
    %v800 = vrcp.pop %v768
    %v801 = vrcp.pop %v769
    %v802 = vrcp.pop %v770
    %v803 = vrcp.pop %v771
    %v804 = vrcp.pop %v772
    %v805 = vrcp.pop %v773
    %v806 = vrcp.pop %v774
    %v807 = vrcp.pop %v775
    %v808 = vrcp.pop %v776
    %v809 = vrcp.pop %v777
    %v810 = vrcp.pop %v778
    %v811 = vrcp.pop %v779
    %v812 = vrcp.pop %v780
    %v813 = vrcp.pop %v781
    %v814 = vrcp.pop %v782
    %v815 = vrcp.pop %v783
    %v816 = vrcp.pop %v784
    %v817 = vrcp.pop %v785
    %v818 = vrcp.pop %v786
    %v819 = vrcp.pop %v787
    %v820 = vrcp.pop %v788
    %v821 = vrcp.pop %v789
    %v822 = vrcp.pop %v790
    %v823 = vrcp.pop %v791
    %v824 = vrcp.pop %v792
    %v825 = vrcp.pop %v793
    %v826 = vmul.f32 %v634, %v794
    %v827 = vmul.f32 %v635, %v795
    %v828 = vmul.f32 %v636, %v796
    %v829 = vmul.f32 %v637, %v797
    %v830 = vmul.f32 %v638, %v798
    %v831 = vmul.f32 %v639, %v799
    %v832 = vmul.f32 %v640, %v800
    %v833 = vmul.f32 %v641, %v801
    %v834 = vmul.f32 %v642, %v802
    %v835 = vmul.f32 %v643, %v803
    %v836 = vmul.f32 %v644, %v804
    %v837 = vmul.f32 %v645, %v805
    %v838 = vmul.f32 %v646, %v806
    %v839 = vmul.f32 %v647, %v807
    %v840 = vmul.f32 %v648, %v808
    %v841 = vmul.f32 %v649, %v809
    %v842 = vmul.f32 %v650, %v810
    %v843 = vmul.f32 %v651, %v811
    %v844 = vmul.f32 %v652, %v812
    %v845 = vmul.f32 %v653, %v813
    %v846 = vmul.f32 %v654, %v814
    %v847 = vmul.f32 %v655, %v815
    %v848 = vmul.f32 %v656, %v816
    %v849 = vmul.f32 %v657, %v817
    %v850 = vmul.f32 %v658, %v818
    %v851 = vmul.f32 %v659, %v819
    %v852 = vmul.f32 %v660, %v820
    %v853 = vmul.f32 %v661, %v821
    %v854 = vmul.f32 %v662, %v822
    %v855 = vmul.f32 %v663, %v823
    %v856 = vmul.f32 %v664, %v824
    %v857 = vmul.f32 %v665, %v825
    %v858 = vld [vmem:[#allocation10] sm:$0xff]
    %v859 = vld [vmem:[#allocation10 + $0x8] sm:$0xff]
    %v860 = vld [vmem:[#allocation10 + $0x10] sm:$0x1]
    %v861 = vld [vmem:[#allocation10 + $0x18] sm:$0x1]
    %v894 = vrot.slane %v826, 7
    %v895 = vrot.slane %v827, 7
    %v896 = vrot.slane %v828, 7
    %v897 = vrot.slane %v829, 7
    %v898 = vrot.slane %v830, 7
    %v899 = vrot.slane %v831, 7
    %v900 = vrot.slane %v832, 7
    %v901 = vrot.slane %v833, 7
    %v902 = vrot.slane %v834, 7
    %v903 = vrot.slane %v835, 7
    %v904 = vrot.slane %v836, 7
    %v905 = vrot.slane %v837, 7
    %v906 = vrot.slane %v838, 7
    %v907 = vrot.slane %v839, 7
    %v908 = vrot.slane %v840, 7
    %v909 = vrot.slane %v841, 7
    %v910 = vrot.slane %v842, 7
    %v911 = vrot.slane %v843, 7
    %v912 = vrot.slane %v844, 7
    %v913 = vrot.slane %v845, 7
    %v914 = vrot.slane %v846, 7
    %v915 = vrot.slane %v847, 7
    %v916 = vrot.slane %v848, 7
    %v917 = vrot.slane %v849, 7
    %v918 = vrot.slane %v850, 7
    %v919 = vrot.slane %v851, 7
    %v920 = vrot.slane %v852, 7
    %v921 = vrot.slane %v853, 7
    %v922 = vrot.slane %v854, 7
    %v923 = vrot.slane %v855, 7
    %v924 = vrot.slane %v856, 7
    %v925 = vrot.slane %v857, 7
    %vm958 = vcmask 1040384
    %v959 = vsel %vm958, 0.0, %v894
    %v960 = vsel %vm958, 0.0, %v895
    %v961 = vsel %vm958, 0.0, %v896
    %v962 = vsel %vm958, 0.0, %v897
    %v963 = vsel %vm958, 0.0, %v898
    %v964 = vsel %vm958, 0.0, %v899
    %v965 = vsel %vm958, 0.0, %v900
    %v966 = vsel %vm958, 0.0, %v901
    %v967 = vsel %vm958, 0.0, %v902
    %v968 = vsel %vm958, 0.0, %v903
    %v969 = vsel %vm958, 0.0, %v904
    %v970 = vsel %vm958, 0.0, %v905
    %v971 = vsel %vm958, 0.0, %v906
    %v972 = vsel %vm958, 0.0, %v907
    %v973 = vsel %vm958, 0.0, %v908
    %v974 = vsel %vm958, 0.0, %v909
    %v975 = vsel %vm958, 0.0, %v910
    %v976 = vsel %vm958, 0.0, %v911
    %v977 = vsel %vm958, 0.0, %v912
    %v978 = vsel %vm958, 0.0, %v913
    %v979 = vsel %vm958, 0.0, %v914
    %v980 = vsel %vm958, 0.0, %v915
    %v981 = vsel %vm958, 0.0, %v916
    %v982 = vsel %vm958, 0.0, %v917
    %v983 = vsel %vm958, 0.0, %v918
    %v984 = vsel %vm958, 0.0, %v919
    %v985 = vsel %vm958, 0.0, %v920
    %v986 = vsel %vm958, 0.0, %v921
    %v987 = vsel %vm958, 0.0, %v922
    %v988 = vsel %vm958, 0.0, %v923
    %v989 = vsel %vm958, 0.0, %v924
    %v990 = vsel %vm958, 0.0, %v925
    %v991 = vrot.slane %v826, 1
    %v992 = vrot.slane %v827, 1
    %v993 = vrot.slane %v828, 1
    %v994 = vrot.slane %v829, 1
    %v995 = vrot.slane %v830, 1
    %v996 = vrot.slane %v831, 1
    %v997 = vrot.slane %v832, 1
    %v998 = vrot.slane %v833, 1
    %v999 = vrot.slane %v834, 1
    %v1000 = vrot.slane %v835, 1
    %v1001 = vrot.slane %v836, 1
    %v1002 = vrot.slane %v837, 1
    %v1003 = vrot.slane %v838, 1
    %v1004 = vrot.slane %v839, 1
    %v1005 = vrot.slane %v840, 1
    %v1006 = vrot.slane %v841, 1
    %v1007 = vrot.slane %v842, 1
    %v1008 = vrot.slane %v843, 1
    %v1009 = vrot.slane %v844, 1
    %v1010 = vrot.slane %v845, 1
    %v1011 = vrot.slane %v846, 1
    %v1012 = vrot.slane %v847, 1
    %v1013 = vrot.slane %v848, 1
    %v1014 = vrot.slane %v849, 1
    %v1015 = vrot.slane %v850, 1
    %v1016 = vrot.slane %v851, 1
    %v1017 = vrot.slane %v852, 1
    %v1018 = vrot.slane %v853, 1
    %v1019 = vrot.slane %v854, 1
    %v1020 = vrot.slane %v855, 1
    %v1021 = vrot.slane %v856, 1
    %v1022 = vrot.slane %v857, 1
    %vm1055 = vcmask 1046528
    %v1056 = vsel %vm1055, %v991, 0.0
    %v1057 = vsel %vm1055, %v992, 0.0
    %v1058 = vsel %vm1055, %v993, 0.0
    %v1059 = vsel %vm1055, %v994, 0.0
    %v1060 = vsel %vm1055, %v995, 0.0
    %v1061 = vsel %vm1055, %v996, 0.0
    %v1062 = vsel %vm1055, %v997, 0.0
    %v1063 = vsel %vm1055, %v998, 0.0
    %v1064 = vsel %vm1055, %v999, 0.0
    %v1065 = vsel %vm1055, %v1000, 0.0
    %v1066 = vsel %vm1055, %v1001, 0.0
    %v1067 = vsel %vm1055, %v1002, 0.0
    %v1068 = vsel %vm1055, %v1003, 0.0
    %v1069 = vsel %vm1055, %v1004, 0.0
    %v1070 = vsel %vm1055, %v1005, 0.0
    %v1071 = vsel %vm1055, %v1006, 0.0
    %v1072 = vsel %vm1055, %v1007, 0.0
    %v1073 = vsel %vm1055, %v1008, 0.0
    %v1074 = vsel %vm1055, %v1009, 0.0
    %v1075 = vsel %vm1055, %v1010, 0.0
    %v1076 = vsel %vm1055, %v1011, 0.0
    %v1077 = vsel %vm1055, %v1012, 0.0
    %v1078 = vsel %vm1055, %v1013, 0.0
    %v1079 = vsel %vm1055, %v1014, 0.0
    %v1080 = vsel %vm1055, %v1015, 0.0
    %v1081 = vsel %vm1055, %v1016, 0.0
    %v1082 = vsel %vm1055, %v1017, 0.0
    %v1083 = vsel %vm1055, %v1018, 0.0
    %v1084 = vsel %vm1055, %v1019, 0.0
    %v1085 = vsel %vm1055, %v1020, 0.0
    %v1086 = vsel %vm1055, %v1021, 0.0
    %v1087 = vsel %vm1055, %v1022, 0.0
    %v1088 = vlaneseq
    %v1089 = vshrl.u32 %v1088, 7
    %v1090 = vsub.s32 0, %v1089
    %v1091 = vrot.slane %v858, %v1090
    %v1092 = vlaneseq
    %v1093 = vshrl.u32 %v1092, 7
    %v1094 = vsub.s32 0, %v1093
    %v1095 = vrot.slane %v859, %v1094
    %v1096 = vmul.f32 %v1091, 0.0
    %v1097 = vmul.f32 %v1095, 0.0
    %v1098 = vmul.f32 %v959, %v1091
    %v1099 = vmul.f32 %v960, %v1095
    %v1100 = vmul.f32 %v961, %v1091
    %v1101 = vmul.f32 %v962, %v1095
    %v1102 = vmul.f32 %v963, %v1091
    %v1103 = vmul.f32 %v964, %v1095
    %v1104 = vmul.f32 %v965, %v1091
    %v1105 = vmul.f32 %v966, %v1095
    %v1106 = vmul.f32 %v967, %v1091
    %v1107 = vmul.f32 %v968, %v1095
    %v1108 = vmul.f32 %v969, %v1091
    %v1109 = vmul.f32 %v970, %v1095
    %v1110 = vmul.f32 %v971, %v1091
    %v1111 = vmul.f32 %v972, %v1095
    %v1112 = vmul.f32 %v975, %v1091
    %v1113 = vmul.f32 %v976, %v1095
    %v1114 = vmul.f32 %v977, %v1091
    %v1115 = vmul.f32 %v978, %v1095
    %v1116 = vmul.f32 %v979, %v1091
    %v1117 = vmul.f32 %v980, %v1095
    %v1118 = vmul.f32 %v981, %v1091
    %v1119 = vmul.f32 %v982, %v1095
    %v1120 = vmul.f32 %v983, %v1091
    %v1121 = vmul.f32 %v984, %v1095
    %v1122 = vmul.f32 %v985, %v1091
    %v1123 = vmul.f32 %v986, %v1095
    %v1124 = vmul.f32 %v987, %v1091
    %v1125 = vmul.f32 %v988, %v1095
    %v1126 = vadd.f32 %v1096, 0.0
    %v1127 = vadd.f32 %v1097, 0.0
    %v1128 = vadd.f32 %v1098, 0.0
    %v1129 = vadd.f32 %v1099, 0.0
    %v1130 = vadd.f32 %v1100, 0.0
    %v1131 = vadd.f32 %v1101, 0.0
    %v1132 = vadd.f32 %v1102, 0.0
    %v1133 = vadd.f32 %v1103, 0.0
    %v1134 = vadd.f32 %v1104, 0.0
    %v1135 = vadd.f32 %v1105, 0.0
    %v1136 = vadd.f32 %v1106, 0.0
    %v1137 = vadd.f32 %v1107, 0.0
    %v1138 = vadd.f32 %v1108, 0.0
    %v1139 = vadd.f32 %v1109, 0.0
    %v1140 = vadd.f32 %v1110, 0.0
    %v1141 = vadd.f32 %v1111, 0.0
    %v1142 = vadd.f32 %v1112, 0.0
    %v1143 = vadd.f32 %v1113, 0.0
    %v1144 = vadd.f32 %v1114, 0.0
    %v1145 = vadd.f32 %v1115, 0.0
    %v1146 = vadd.f32 %v1116, 0.0
    %v1147 = vadd.f32 %v1117, 0.0
    %v1148 = vadd.f32 %v1118, 0.0
    %v1149 = vadd.f32 %v1119, 0.0
    %v1150 = vadd.f32 %v1120, 0.0
    %v1151 = vadd.f32 %v1121, 0.0
    %v1152 = vadd.f32 %v1122, 0.0
    %v1153 = vadd.f32 %v1123, 0.0
    %v1154 = vadd.f32 %v1124, 0.0
    %v1155 = vadd.f32 %v1125, 0.0
    %v1156 = vlaneseq
    %v1157 = vshrl.u32 %v1156, 7
    %v1158 = vsub.s32 3, %v1157
    %v1159 = vrot.slane %v858, %v1158
    %v1160 = vlaneseq
    %v1161 = vshrl.u32 %v1160, 7
    %v1162 = vsub.s32 3, %v1161
    %v1163 = vrot.slane %v859, %v1162
    %v1164 = vmul.f32 %v959, %v1159
    %v1165 = vmul.f32 %v960, %v1163
    %v1166 = vmul.f32 %v961, %v1159
    %v1167 = vmul.f32 %v962, %v1163
    %v1168 = vmul.f32 %v963, %v1159
    %v1169 = vmul.f32 %v964, %v1163
    %v1170 = vmul.f32 %v965, %v1159
    %v1171 = vmul.f32 %v966, %v1163
    %v1172 = vmul.f32 %v967, %v1159
    %v1173 = vmul.f32 %v968, %v1163
    %v1174 = vmul.f32 %v969, %v1159
    %v1175 = vmul.f32 %v970, %v1163
    %v1176 = vmul.f32 %v971, %v1159
    %v1177 = vmul.f32 %v972, %v1163
    %v1178 = vmul.f32 %v973, %v1159
    %v1179 = vmul.f32 %v974, %v1163
    %v1180 = vmul.f32 %v975, %v1159
    %v1181 = vmul.f32 %v976, %v1163
    %v1182 = vmul.f32 %v977, %v1159
    %v1183 = vmul.f32 %v978, %v1163
    %v1184 = vmul.f32 %v979, %v1159
    %v1185 = vmul.f32 %v980, %v1163
    %v1186 = vmul.f32 %v981, %v1159
    %v1187 = vmul.f32 %v982, %v1163
    %v1188 = vmul.f32 %v983, %v1159
    %v1189 = vmul.f32 %v984, %v1163
    %v1190 = vmul.f32 %v985, %v1159
    %v1191 = vmul.f32 %v986, %v1163
    %v1192 = vmul.f32 %v987, %v1159
    %v1193 = vmul.f32 %v988, %v1163
    %v1194 = vmul.f32 %v989, %v1159
    %v1195 = vmul.f32 %v990, %v1163
    %v1196 = vadd.f32 %v1126, %v1164
    %v1197 = vadd.f32 %v1127, %v1165
    %v1198 = vadd.f32 %v1128, %v1166
    %v1199 = vadd.f32 %v1129, %v1167
    %v1200 = vadd.f32 %v1130, %v1168
    %v1201 = vadd.f32 %v1131, %v1169
    %v1202 = vadd.f32 %v1132, %v1170
    %v1203 = vadd.f32 %v1133, %v1171
    %v1204 = vadd.f32 %v1134, %v1172
    %v1205 = vadd.f32 %v1135, %v1173
    %v1206 = vadd.f32 %v1136, %v1174
    %v1207 = vadd.f32 %v1137, %v1175
    %v1208 = vadd.f32 %v1138, %v1176
    %v1209 = vadd.f32 %v1139, %v1177
    %v1210 = vadd.f32 %v1140, %v1178
    %v1211 = vadd.f32 %v1141, %v1179
    %v1212 = vadd.f32 %v1126, %v1180
    %v1213 = vadd.f32 %v1127, %v1181
    %v1214 = vadd.f32 %v1142, %v1182
    %v1215 = vadd.f32 %v1143, %v1183
    %v1216 = vadd.f32 %v1144, %v1184
    %v1217 = vadd.f32 %v1145, %v1185
    %v1218 = vadd.f32 %v1146, %v1186
    %v1219 = vadd.f32 %v1147, %v1187
    %v1220 = vadd.f32 %v1148, %v1188
    %v1221 = vadd.f32 %v1149, %v1189
    %v1222 = vadd.f32 %v1150, %v1190
    %v1223 = vadd.f32 %v1151, %v1191
    %v1224 = vadd.f32 %v1152, %v1192
    %v1225 = vadd.f32 %v1153, %v1193
    %v1226 = vadd.f32 %v1154, %v1194
    %v1227 = vadd.f32 %v1155, %v1195
    %v1228 = vlaneseq
    %v1229 = vshrl.u32 %v1228, 7
    %v1230 = vsub.s32 6, %v1229
    %v1231 = vrot.slane %v858, %v1230
    %v1232 = vlaneseq
    %v1233 = vshrl.u32 %v1232, 7
    %v1234 = vsub.s32 6, %v1233
    %v1235 = vrot.slane %v859, %v1234
    %v1236 = vmul.f32 %v961, %v1231
    %v1237 = vmul.f32 %v962, %v1235
    %v1238 = vmul.f32 %v963, %v1231
    %v1239 = vmul.f32 %v964, %v1235
    %v1240 = vmul.f32 %v965, %v1231
    %v1241 = vmul.f32 %v966, %v1235
    %v1242 = vmul.f32 %v967, %v1231
    %v1243 = vmul.f32 %v968, %v1235
    %v1244 = vmul.f32 %v969, %v1231
    %v1245 = vmul.f32 %v970, %v1235
    %v1246 = vmul.f32 %v971, %v1231
    %v1247 = vmul.f32 %v972, %v1235
    %v1248 = vmul.f32 %v973, %v1231
    %v1249 = vmul.f32 %v974, %v1235
    %v1250 = vmul.f32 %v1231, 0.0
    %v1251 = vmul.f32 %v1235, 0.0
    %v1252 = vmul.f32 %v977, %v1231
    %v1253 = vmul.f32 %v978, %v1235
    %v1254 = vmul.f32 %v979, %v1231
    %v1255 = vmul.f32 %v980, %v1235
    %v1256 = vmul.f32 %v981, %v1231
    %v1257 = vmul.f32 %v982, %v1235
    %v1258 = vmul.f32 %v983, %v1231
    %v1259 = vmul.f32 %v984, %v1235
    %v1260 = vmul.f32 %v985, %v1231
    %v1261 = vmul.f32 %v986, %v1235
    %v1262 = vmul.f32 %v987, %v1231
    %v1263 = vmul.f32 %v988, %v1235
    %v1264 = vmul.f32 %v989, %v1231
    %v1265 = vmul.f32 %v990, %v1235
    %v1266 = vadd.f32 %v1196, %v1236
    %v1267 = vadd.f32 %v1197, %v1237
    %v1268 = vadd.f32 %v1198, %v1238
    %v1269 = vadd.f32 %v1199, %v1239
    %v1270 = vadd.f32 %v1200, %v1240
    %v1271 = vadd.f32 %v1201, %v1241
    %v1272 = vadd.f32 %v1202, %v1242
    %v1273 = vadd.f32 %v1203, %v1243
    %v1274 = vadd.f32 %v1204, %v1244
    %v1275 = vadd.f32 %v1205, %v1245
    %v1276 = vadd.f32 %v1206, %v1246
    %v1277 = vadd.f32 %v1207, %v1247
    %v1278 = vadd.f32 %v1208, %v1248
    %v1279 = vadd.f32 %v1209, %v1249
    %v1280 = vadd.f32 %v1210, %v1250
    %v1281 = vadd.f32 %v1211, %v1251
    %v1282 = vadd.f32 %v1212, %v1252
    %v1283 = vadd.f32 %v1213, %v1253
    %v1284 = vadd.f32 %v1214, %v1254
    %v1285 = vadd.f32 %v1215, %v1255
    %v1286 = vadd.f32 %v1216, %v1256
    %v1287 = vadd.f32 %v1217, %v1257
    %v1288 = vadd.f32 %v1218, %v1258
    %v1289 = vadd.f32 %v1219, %v1259
    %v1290 = vadd.f32 %v1220, %v1260
    %v1291 = vadd.f32 %v1221, %v1261
    %v1292 = vadd.f32 %v1222, %v1262
    %v1293 = vadd.f32 %v1223, %v1263
    %v1294 = vadd.f32 %v1224, %v1264
    %v1295 = vadd.f32 %v1225, %v1265
    %v1296 = vadd.f32 %v1226, %v1250
    %v1297 = vadd.f32 %v1227, %v1251
    %v1298 = vlaneseq
    %v1299 = vshrl.u32 %v1298, 7
    %v1300 = vsub.s32 1, %v1299
    %v1301 = vrot.slane %v858, %v1300
    %v1302 = vlaneseq
    %v1303 = vshrl.u32 %v1302, 7
    %v1304 = vsub.s32 1, %v1303
    %v1305 = vrot.slane %v859, %v1304
    %v1306 = vmul.f32 %v1301, 0.0
    %v1307 = vmul.f32 %v1305, 0.0
    %v1308 = vmul.f32 %v826, %v1301
    %v1309 = vmul.f32 %v827, %v1305
    %v1310 = vmul.f32 %v828, %v1301
    %v1311 = vmul.f32 %v829, %v1305
    %v1312 = vmul.f32 %v830, %v1301
    %v1313 = vmul.f32 %v831, %v1305
    %v1314 = vmul.f32 %v832, %v1301
    %v1315 = vmul.f32 %v833, %v1305
    %v1316 = vmul.f32 %v834, %v1301
    %v1317 = vmul.f32 %v835, %v1305
    %v1318 = vmul.f32 %v836, %v1301
    %v1319 = vmul.f32 %v837, %v1305
    %v1320 = vmul.f32 %v838, %v1301
    %v1321 = vmul.f32 %v839, %v1305
    %v1322 = vmul.f32 %v842, %v1301
    %v1323 = vmul.f32 %v843, %v1305
    %v1324 = vmul.f32 %v844, %v1301
    %v1325 = vmul.f32 %v845, %v1305
    %v1326 = vmul.f32 %v846, %v1301
    %v1327 = vmul.f32 %v847, %v1305
    %v1328 = vmul.f32 %v848, %v1301
    %v1329 = vmul.f32 %v849, %v1305
    %v1330 = vmul.f32 %v850, %v1301
    %v1331 = vmul.f32 %v851, %v1305
    %v1332 = vmul.f32 %v852, %v1301
    %v1333 = vmul.f32 %v853, %v1305
    %v1334 = vmul.f32 %v854, %v1301
    %v1335 = vmul.f32 %v855, %v1305
    %v1336 = vadd.f32 %v1266, %v1306
    %v1337 = vadd.f32 %v1267, %v1307
    %v1338 = vadd.f32 %v1268, %v1308
    %v1339 = vadd.f32 %v1269, %v1309
    %v1340 = vadd.f32 %v1270, %v1310
    %v1341 = vadd.f32 %v1271, %v1311
    %v1342 = vadd.f32 %v1272, %v1312
    %v1343 = vadd.f32 %v1273, %v1313
    %v1344 = vadd.f32 %v1274, %v1314
    %v1345 = vadd.f32 %v1275, %v1315
    %v1346 = vadd.f32 %v1276, %v1316
    %v1347 = vadd.f32 %v1277, %v1317
    %v1348 = vadd.f32 %v1278, %v1318
    %v1349 = vadd.f32 %v1279, %v1319
    %v1350 = vadd.f32 %v1280, %v1320
    %v1351 = vadd.f32 %v1281, %v1321
    %v1352 = vadd.f32 %v1282, %v1306
    %v1353 = vadd.f32 %v1283, %v1307
    %v1354 = vadd.f32 %v1284, %v1322
    %v1355 = vadd.f32 %v1285, %v1323
    %v1356 = vadd.f32 %v1286, %v1324
    %v1357 = vadd.f32 %v1287, %v1325
    %v1358 = vadd.f32 %v1288, %v1326
    %v1359 = vadd.f32 %v1289, %v1327
    %v1360 = vadd.f32 %v1290, %v1328
    %v1361 = vadd.f32 %v1291, %v1329
    %v1362 = vadd.f32 %v1292, %v1330
    %v1363 = vadd.f32 %v1293, %v1331
    %v1364 = vadd.f32 %v1294, %v1332
    %v1365 = vadd.f32 %v1295, %v1333
    %v1366 = vadd.f32 %v1296, %v1334
    %v1367 = vadd.f32 %v1297, %v1335
    %v1368 = vlaneseq
    %v1369 = vshrl.u32 %v1368, 7
    %v1370 = vsub.s32 4, %v1369
    %v1371 = vrot.slane %v858, %v1370
    %v1372 = vlaneseq
    %v1373 = vshrl.u32 %v1372, 7
    %v1374 = vsub.s32 4, %v1373
    %v1375 = vrot.slane %v859, %v1374
    %v1376 = vmul.f32 %v826, %v1371
    %v1377 = vmul.f32 %v827, %v1375
    %v1378 = vmul.f32 %v828, %v1371
    %v1379 = vmul.f32 %v829, %v1375
    %v1380 = vmul.f32 %v830, %v1371
    %v1381 = vmul.f32 %v831, %v1375
    %v1382 = vmul.f32 %v832, %v1371
    %v1383 = vmul.f32 %v833, %v1375
    %v1384 = vmul.f32 %v834, %v1371
    %v1385 = vmul.f32 %v835, %v1375
    %v1386 = vmul.f32 %v836, %v1371
    %v1387 = vmul.f32 %v837, %v1375
    %v1388 = vmul.f32 %v838, %v1371
    %v1389 = vmul.f32 %v839, %v1375
    %v1390 = vmul.f32 %v840, %v1371
    %v1391 = vmul.f32 %v841, %v1375
    %v1392 = vmul.f32 %v842, %v1371
    %v1393 = vmul.f32 %v843, %v1375
    %v1394 = vmul.f32 %v844, %v1371
    %v1395 = vmul.f32 %v845, %v1375
    %v1396 = vmul.f32 %v846, %v1371
    %v1397 = vmul.f32 %v847, %v1375
    %v1398 = vmul.f32 %v848, %v1371
    %v1399 = vmul.f32 %v849, %v1375
    %v1400 = vmul.f32 %v850, %v1371
    %v1401 = vmul.f32 %v851, %v1375
    %v1402 = vmul.f32 %v852, %v1371
    %v1403 = vmul.f32 %v853, %v1375
    %v1404 = vmul.f32 %v854, %v1371
    %v1405 = vmul.f32 %v855, %v1375
    %v1406 = vmul.f32 %v856, %v1371
    %v1407 = vmul.f32 %v857, %v1375
    %v1408 = vadd.f32 %v1336, %v1376
    %v1409 = vadd.f32 %v1337, %v1377
    %v1410 = vadd.f32 %v1338, %v1378
    %v1411 = vadd.f32 %v1339, %v1379
    %v1412 = vadd.f32 %v1340, %v1380
    %v1413 = vadd.f32 %v1341, %v1381
    %v1414 = vadd.f32 %v1342, %v1382
    %v1415 = vadd.f32 %v1343, %v1383
    %v1416 = vadd.f32 %v1344, %v1384
    %v1417 = vadd.f32 %v1345, %v1385
    %v1418 = vadd.f32 %v1346, %v1386
    %v1419 = vadd.f32 %v1347, %v1387
    %v1420 = vadd.f32 %v1348, %v1388
    %v1421 = vadd.f32 %v1349, %v1389
    %v1422 = vadd.f32 %v1350, %v1390
    %v1423 = vadd.f32 %v1351, %v1391
    %v1424 = vadd.f32 %v1352, %v1392
    %v1425 = vadd.f32 %v1353, %v1393
    %v1426 = vadd.f32 %v1354, %v1394
    %v1427 = vadd.f32 %v1355, %v1395
    %v1428 = vadd.f32 %v1356, %v1396
    %v1429 = vadd.f32 %v1357, %v1397
    %v1430 = vadd.f32 %v1358, %v1398
    %v1431 = vadd.f32 %v1359, %v1399
    %v1432 = vadd.f32 %v1360, %v1400
    %v1433 = vadd.f32 %v1361, %v1401
    %v1434 = vadd.f32 %v1362, %v1402
    %v1435 = vadd.f32 %v1363, %v1403
    %v1436 = vadd.f32 %v1364, %v1404
    %v1437 = vadd.f32 %v1365, %v1405
    %v1438 = vadd.f32 %v1366, %v1406
    %v1439 = vadd.f32 %v1367, %v1407
    %v1440 = vlaneseq
    %v1441 = vshrl.u32 %v1440, 7
    %v1442 = vsub.s32 7, %v1441
    %v1443 = vrot.slane %v858, %v1442
    %v1444 = vlaneseq
    %v1445 = vshrl.u32 %v1444, 7
    %v1446 = vsub.s32 7, %v1445
    %v1447 = vrot.slane %v859, %v1446
    %v1448 = vmul.f32 %v828, %v1443
    %v1449 = vmul.f32 %v829, %v1447
    %v1450 = vmul.f32 %v830, %v1443
    %v1451 = vmul.f32 %v831, %v1447
    %v1452 = vmul.f32 %v832, %v1443
    %v1453 = vmul.f32 %v833, %v1447
    %v1454 = vmul.f32 %v834, %v1443
    %v1455 = vmul.f32 %v835, %v1447
    %v1456 = vmul.f32 %v836, %v1443
    %v1457 = vmul.f32 %v837, %v1447
    %v1458 = vmul.f32 %v838, %v1443
    %v1459 = vmul.f32 %v839, %v1447
    %v1460 = vmul.f32 %v840, %v1443
    %v1461 = vmul.f32 %v841, %v1447
    %v1462 = vmul.f32 %v1443, 0.0
    %v1463 = vmul.f32 %v1447, 0.0
    %v1464 = vmul.f32 %v844, %v1443
    %v1465 = vmul.f32 %v845, %v1447
    %v1466 = vmul.f32 %v846, %v1443
    %v1467 = vmul.f32 %v847, %v1447
    %v1468 = vmul.f32 %v848, %v1443
    %v1469 = vmul.f32 %v849, %v1447
    %v1470 = vmul.f32 %v850, %v1443
    %v1471 = vmul.f32 %v851, %v1447
    %v1472 = vmul.f32 %v852, %v1443
    %v1473 = vmul.f32 %v853, %v1447
    %v1474 = vmul.f32 %v854, %v1443
    %v1475 = vmul.f32 %v855, %v1447
    %v1476 = vmul.f32 %v856, %v1443
    %v1477 = vmul.f32 %v857, %v1447
    %v1478 = vadd.f32 %v1408, %v1448
    %v1479 = vadd.f32 %v1409, %v1449
    %v1480 = vadd.f32 %v1410, %v1450
    %v1481 = vadd.f32 %v1411, %v1451
    %v1482 = vadd.f32 %v1412, %v1452
    %v1483 = vadd.f32 %v1413, %v1453
    %v1484 = vadd.f32 %v1414, %v1454
    %v1485 = vadd.f32 %v1415, %v1455
    %v1486 = vadd.f32 %v1416, %v1456
    %v1487 = vadd.f32 %v1417, %v1457
    %v1488 = vadd.f32 %v1418, %v1458
    %v1489 = vadd.f32 %v1419, %v1459
    %v1490 = vadd.f32 %v1420, %v1460
    %v1491 = vadd.f32 %v1421, %v1461
    %v1492 = vadd.f32 %v1422, %v1462
    %v1493 = vadd.f32 %v1423, %v1463
    %v1494 = vadd.f32 %v1424, %v1464
    %v1495 = vadd.f32 %v1425, %v1465
    %v1496 = vadd.f32 %v1426, %v1466
    %v1497 = vadd.f32 %v1427, %v1467
    %v1498 = vadd.f32 %v1428, %v1468
    %v1499 = vadd.f32 %v1429, %v1469
    %v1500 = vadd.f32 %v1430, %v1470
    %v1501 = vadd.f32 %v1431, %v1471
    %v1502 = vadd.f32 %v1432, %v1472
    %v1503 = vadd.f32 %v1433, %v1473
    %v1504 = vadd.f32 %v1434, %v1474
    %v1505 = vadd.f32 %v1435, %v1475
    %v1506 = vadd.f32 %v1436, %v1476
    %v1507 = vadd.f32 %v1437, %v1477
    %v1508 = vadd.f32 %v1438, %v1462
    %v1509 = vadd.f32 %v1439, %v1463
    %v1510 = vlaneseq
    %v1511 = vshrl.u32 %v1510, 7
    %v1512 = vsub.s32 2, %v1511
    %v1513 = vrot.slane %v858, %v1512
    %v1514 = vlaneseq
    %v1515 = vshrl.u32 %v1514, 7
    %v1516 = vsub.s32 2, %v1515
    %v1517 = vrot.slane %v859, %v1516
    %v1518 = vmul.f32 %v1513, 0.0
    %v1519 = vmul.f32 %v1517, 0.0
    %v1520 = vmul.f32 %v1056, %v1513
    %v1521 = vmul.f32 %v1057, %v1517
    %v1522 = vmul.f32 %v1058, %v1513
    %v1523 = vmul.f32 %v1059, %v1517
    %v1524 = vmul.f32 %v1060, %v1513
    %v1525 = vmul.f32 %v1061, %v1517
    %v1526 = vmul.f32 %v1062, %v1513
    %v1527 = vmul.f32 %v1063, %v1517
    %v1528 = vmul.f32 %v1064, %v1513
    %v1529 = vmul.f32 %v1065, %v1517
    %v1530 = vmul.f32 %v1066, %v1513
    %v1531 = vmul.f32 %v1067, %v1517
    %v1532 = vmul.f32 %v1068, %v1513
    %v1533 = vmul.f32 %v1069, %v1517
    %v1534 = vmul.f32 %v1072, %v1513
    %v1535 = vmul.f32 %v1073, %v1517
    %v1536 = vmul.f32 %v1074, %v1513
    %v1537 = vmul.f32 %v1075, %v1517
    %v1538 = vmul.f32 %v1076, %v1513
    %v1539 = vmul.f32 %v1077, %v1517
    %v1540 = vmul.f32 %v1078, %v1513
    %v1541 = vmul.f32 %v1079, %v1517
    %v1542 = vmul.f32 %v1080, %v1513
    %v1543 = vmul.f32 %v1081, %v1517
    %v1544 = vmul.f32 %v1082, %v1513
    %v1545 = vmul.f32 %v1083, %v1517
    %v1546 = vmul.f32 %v1084, %v1513
    %v1547 = vmul.f32 %v1085, %v1517
    %v1548 = vadd.f32 %v1478, %v1518
    %v1549 = vadd.f32 %v1479, %v1519
    %v1550 = vadd.f32 %v1480, %v1520
    %v1551 = vadd.f32 %v1481, %v1521
    %v1552 = vadd.f32 %v1482, %v1522
    %v1553 = vadd.f32 %v1483, %v1523
    %v1554 = vadd.f32 %v1484, %v1524
    %v1555 = vadd.f32 %v1485, %v1525
    %v1556 = vadd.f32 %v1486, %v1526
    %v1557 = vadd.f32 %v1487, %v1527
    %v1558 = vadd.f32 %v1488, %v1528
    %v1559 = vadd.f32 %v1489, %v1529
    %v1560 = vadd.f32 %v1490, %v1530
    %v1561 = vadd.f32 %v1491, %v1531
    %v1562 = vadd.f32 %v1492, %v1532
    %v1563 = vadd.f32 %v1493, %v1533
    %v1564 = vadd.f32 %v1494, %v1518
    %v1565 = vadd.f32 %v1495, %v1519
    %v1566 = vadd.f32 %v1496, %v1534
    %v1567 = vadd.f32 %v1497, %v1535
    %v1568 = vadd.f32 %v1498, %v1536
    %v1569 = vadd.f32 %v1499, %v1537
    %v1570 = vadd.f32 %v1500, %v1538
    %v1571 = vadd.f32 %v1501, %v1539
    %v1572 = vadd.f32 %v1502, %v1540
    %v1573 = vadd.f32 %v1503, %v1541
    %v1574 = vadd.f32 %v1504, %v1542
    %v1575 = vadd.f32 %v1505, %v1543
    %v1576 = vadd.f32 %v1506, %v1544
    %v1577 = vadd.f32 %v1507, %v1545
    %v1578 = vadd.f32 %v1508, %v1546
    %v1579 = vadd.f32 %v1509, %v1547
    %v1580 = vlaneseq
    %v1581 = vshrl.u32 %v1580, 7
    %v1582 = vsub.s32 5, %v1581
    %v1583 = vrot.slane %v858, %v1582
    %v1584 = vlaneseq
    %v1585 = vshrl.u32 %v1584, 7
    %v1586 = vsub.s32 5, %v1585
    %v1587 = vrot.slane %v859, %v1586
    %v1588 = vmul.f32 %v1056, %v1583
    %v1589 = vmul.f32 %v1057, %v1587
    %v1590 = vmul.f32 %v1058, %v1583
    %v1591 = vmul.f32 %v1059, %v1587
    %v1592 = vmul.f32 %v1060, %v1583
    %v1593 = vmul.f32 %v1061, %v1587
    %v1594 = vmul.f32 %v1062, %v1583
    %v1595 = vmul.f32 %v1063, %v1587
    %v1596 = vmul.f32 %v1064, %v1583
    %v1597 = vmul.f32 %v1065, %v1587
    %v1598 = vmul.f32 %v1066, %v1583
    %v1599 = vmul.f32 %v1067, %v1587
    %v1600 = vmul.f32 %v1068, %v1583
    %v1601 = vmul.f32 %v1069, %v1587
    %v1602 = vmul.f32 %v1070, %v1583
    %v1603 = vmul.f32 %v1071, %v1587
    %v1604 = vmul.f32 %v1072, %v1583
    %v1605 = vmul.f32 %v1073, %v1587
    %v1606 = vmul.f32 %v1074, %v1583
    %v1607 = vmul.f32 %v1075, %v1587
    %v1608 = vmul.f32 %v1076, %v1583
    %v1609 = vmul.f32 %v1077, %v1587
    %v1610 = vmul.f32 %v1078, %v1583
    %v1611 = vmul.f32 %v1079, %v1587
    %v1612 = vmul.f32 %v1080, %v1583
    %v1613 = vmul.f32 %v1081, %v1587
    %v1614 = vmul.f32 %v1082, %v1583
    %v1615 = vmul.f32 %v1083, %v1587
    %v1616 = vmul.f32 %v1084, %v1583
    %v1617 = vmul.f32 %v1085, %v1587
    %v1618 = vmul.f32 %v1086, %v1583
    %v1619 = vmul.f32 %v1087, %v1587
    %v1620 = vadd.f32 %v1548, %v1588
    %v1621 = vadd.f32 %v1549, %v1589
    %v1622 = vadd.f32 %v1550, %v1590
    %v1623 = vadd.f32 %v1551, %v1591
    %v1624 = vadd.f32 %v1552, %v1592
    %v1625 = vadd.f32 %v1553, %v1593
    %v1626 = vadd.f32 %v1554, %v1594
    %v1627 = vadd.f32 %v1555, %v1595
    %v1628 = vadd.f32 %v1556, %v1596
    %v1629 = vadd.f32 %v1557, %v1597
    %v1630 = vadd.f32 %v1558, %v1598
    %v1631 = vadd.f32 %v1559, %v1599
    %v1632 = vadd.f32 %v1560, %v1600
    %v1633 = vadd.f32 %v1561, %v1601
    %v1634 = vadd.f32 %v1562, %v1602
    %v1635 = vadd.f32 %v1563, %v1603
    %v1636 = vadd.f32 %v1564, %v1604
    %v1637 = vadd.f32 %v1565, %v1605
    %v1638 = vadd.f32 %v1566, %v1606
    %v1639 = vadd.f32 %v1567, %v1607
    %v1640 = vadd.f32 %v1568, %v1608
    %v1641 = vadd.f32 %v1569, %v1609
    %v1642 = vadd.f32 %v1570, %v1610
    %v1643 = vadd.f32 %v1571, %v1611
    %v1644 = vadd.f32 %v1572, %v1612
    %v1645 = vadd.f32 %v1573, %v1613
    %v1646 = vadd.f32 %v1574, %v1614
    %v1647 = vadd.f32 %v1575, %v1615
    %v1648 = vadd.f32 %v1576, %v1616
    %v1649 = vadd.f32 %v1577, %v1617
    %v1650 = vadd.f32 %v1578, %v1618
    %v1651 = vadd.f32 %v1579, %v1619
    %v1652 = vlaneseq
    %v1653 = vshrl.u32 %v1652, 7
    %v1654 = vsub.s32 0, %v1653
    %v1655 = vrot.slane %v860, %v1654
    %v1656 = vlaneseq
    %v1657 = vshrl.u32 %v1656, 7
    %v1658 = vsub.s32 0, %v1657
    %v1659 = vrot.slane %v861, %v1658
    %v1660 = vmul.f32 %v1058, %v1655
    %v1661 = vmul.f32 %v1059, %v1659
    %v1662 = vmul.f32 %v1060, %v1655
    %v1663 = vmul.f32 %v1061, %v1659
    %v1664 = vmul.f32 %v1062, %v1655
    %v1665 = vmul.f32 %v1063, %v1659
    %v1666 = vmul.f32 %v1064, %v1655
    %v1667 = vmul.f32 %v1065, %v1659
    %v1668 = vmul.f32 %v1066, %v1655
    %v1669 = vmul.f32 %v1067, %v1659
    %v1670 = vmul.f32 %v1068, %v1655
    %v1671 = vmul.f32 %v1069, %v1659
    %v1672 = vmul.f32 %v1070, %v1655
    %v1673 = vmul.f32 %v1071, %v1659
    %v1674 = vmul.f32 %v1655, 0.0
    %v1675 = vmul.f32 %v1659, 0.0
    %v1676 = vmul.f32 %v1074, %v1655
    %v1677 = vmul.f32 %v1075, %v1659
    %v1678 = vmul.f32 %v1076, %v1655
    %v1679 = vmul.f32 %v1077, %v1659
    %v1680 = vmul.f32 %v1078, %v1655
    %v1681 = vmul.f32 %v1079, %v1659
    %v1682 = vmul.f32 %v1080, %v1655
    %v1683 = vmul.f32 %v1081, %v1659
    %v1684 = vmul.f32 %v1082, %v1655
    %v1685 = vmul.f32 %v1083, %v1659
    %v1686 = vmul.f32 %v1084, %v1655
    %v1687 = vmul.f32 %v1085, %v1659
    %v1688 = vmul.f32 %v1086, %v1655
    %v1689 = vmul.f32 %v1087, %v1659
    %v1690 = vadd.f32 %v1620, %v1660
    %v1691 = vadd.f32 %v1621, %v1661
    %v1692 = vadd.f32 %v1622, %v1662
    %v1693 = vadd.f32 %v1623, %v1663
    %v1694 = vadd.f32 %v1624, %v1664
    %v1695 = vadd.f32 %v1625, %v1665
    %v1696 = vadd.f32 %v1626, %v1666
    %v1697 = vadd.f32 %v1627, %v1667
    %v1698 = vadd.f32 %v1628, %v1668
    %v1699 = vadd.f32 %v1629, %v1669
    %v1700 = vadd.f32 %v1630, %v1670
    %v1701 = vadd.f32 %v1631, %v1671
    %v1702 = vadd.f32 %v1632, %v1672
    %v1703 = vadd.f32 %v1633, %v1673
    %v1704 = vadd.f32 %v1634, %v1674
    %v1705 = vadd.f32 %v1635, %v1675
    %v1706 = vadd.f32 %v1636, %v1676
    %v1707 = vadd.f32 %v1637, %v1677
    %v1708 = vadd.f32 %v1638, %v1678
    %v1709 = vadd.f32 %v1639, %v1679
    %v1710 = vadd.f32 %v1640, %v1680
    %v1711 = vadd.f32 %v1641, %v1681
    %v1712 = vadd.f32 %v1642, %v1682
    %v1713 = vadd.f32 %v1643, %v1683
    %v1714 = vadd.f32 %v1644, %v1684
    %v1715 = vadd.f32 %v1645, %v1685
    %v1716 = vadd.f32 %v1646, %v1686
    %v1717 = vadd.f32 %v1647, %v1687
    %v1718 = vadd.f32 %v1648, %v1688
    %v1719 = vadd.f32 %v1649, %v1689
    %v1720 = vadd.f32 %v1650, %v1674
    %v1721 = vadd.f32 %v1651, %v1675
    %v1722 = vld [vmem:[#allocation11] sm:$0x3]
    %v1723 = vld [vmem:[#allocation13] sm:$0x3]
    %v1724 = vadd.f32 %v1690, %v1692
    %v1725 = vadd.f32 %v1724, %v1694
    %v1726 = vadd.f32 %v1725, %v1696
    %v1727 = vadd.f32 %v1726, %v1698
    %v1728 = vadd.f32 %v1727, %v1700
    %v1729 = vadd.f32 %v1728, %v1702
    %v1730 = vadd.f32 %v1729, %v1704
    %v1731 = vadd.f32 %v1730, %v1706
    %v1732 = vadd.f32 %v1731, %v1708
    %v1733 = vadd.f32 %v1732, %v1710
    %v1734 = vadd.f32 %v1733, %v1712
    %v1735 = vadd.f32 %v1734, %v1714
    %v1736 = vadd.f32 %v1735, %v1716
    %v1737 = vadd.f32 %v1736, %v1718
    %v1738 = vadd.f32 %v1737, %v1720
    %v1739 = vrot.slane %v1738, 4
    %v1740 = vadd.f32 %v1738, %v1739
    %v1741 = vrot.slane %v1740, 2
    %v1742 = vadd.f32 %v1740, %v1741
    %v1743 = vrot.slane %v1742, 1
    %v1744 = vadd.f32 %v1742, %v1743
    %v1745 = vadd.f32 %v1691, %v1693
    %v1746 = vadd.f32 %v1745, %v1695
    %v1747 = vadd.f32 %v1746, %v1697
    %v1748 = vadd.f32 %v1747, %v1699
    %v1749 = vadd.f32 %v1748, %v1701
    %v1750 = vadd.f32 %v1749, %v1703
    %v1751 = vadd.f32 %v1750, %v1705
    %v1752 = vadd.f32 %v1751, %v1707
    %v1753 = vadd.f32 %v1752, %v1709
    %v1754 = vadd.f32 %v1753, %v1711
    %v1755 = vadd.f32 %v1754, %v1713
    %v1756 = vadd.f32 %v1755, %v1715
    %v1757 = vadd.f32 %v1756, %v1717
    %v1758 = vadd.f32 %v1757, %v1719
    %v1759 = vadd.f32 %v1758, %v1721
    %v1760 = vrot.slane %v1759, 4
    %v1761 = vadd.f32 %v1759, %v1760
    %v1762 = vrot.slane %v1761, 2
    %v1763 = vadd.f32 %v1761, %v1762
    %v1764 = vrot.slane %v1763, 1
    %v1765 = vadd.f32 %v1763, %v1764
    %v1766 = vmul.f32 %v1744, %v446
    %v1767 = vmul.f32 %v1765, %v446
    %v1768 = vsub.f32 %v1690, %v1766
    %v1769 = vsub.f32 %v1691, %v1767
    %v1770 = vsub.f32 %v1692, %v1766
    %v1771 = vsub.f32 %v1693, %v1767
    %v1772 = vsub.f32 %v1694, %v1766
    %v1773 = vsub.f32 %v1695, %v1767
    %v1774 = vsub.f32 %v1696, %v1766
    %v1775 = vsub.f32 %v1697, %v1767
    %v1776 = vsub.f32 %v1698, %v1766
    %v1777 = vsub.f32 %v1699, %v1767
    %v1778 = vsub.f32 %v1700, %v1766
    %v1779 = vsub.f32 %v1701, %v1767
    %v1780 = vsub.f32 %v1702, %v1766
    %v1781 = vsub.f32 %v1703, %v1767
    %v1782 = vsub.f32 %v1704, %v1766
    %v1783 = vsub.f32 %v1705, %v1767
    %v1784 = vsub.f32 %v1706, %v1766
    %v1785 = vsub.f32 %v1707, %v1767
    %v1786 = vsub.f32 %v1708, %v1766
    %v1787 = vsub.f32 %v1709, %v1767
    %v1788 = vsub.f32 %v1710, %v1766
    %v1789 = vsub.f32 %v1711, %v1767
    %v1790 = vsub.f32 %v1712, %v1766
    %v1791 = vsub.f32 %v1713, %v1767
    %v1792 = vsub.f32 %v1714, %v1766
    %v1793 = vsub.f32 %v1715, %v1767
    %v1794 = vsub.f32 %v1716, %v1766
    %v1795 = vsub.f32 %v1717, %v1767
    %v1796 = vsub.f32 %v1718, %v1766
    %v1797 = vsub.f32 %v1719, %v1767
    %v1798 = vsub.f32 %v1720, %v1766
    %v1799 = vsub.f32 %v1721, %v1767
    %v1800 = vmul.f32 %v1768, %v1768
    %v1801 = vmul.f32 %v1769, %v1769
    %v1802 = vmul.f32 %v1770, %v1770
    %v1803 = vmul.f32 %v1771, %v1771
    %v1804 = vmul.f32 %v1772, %v1772
    %v1805 = vmul.f32 %v1773, %v1773
    %v1806 = vmul.f32 %v1774, %v1774
    %v1807 = vmul.f32 %v1775, %v1775
    %v1808 = vmul.f32 %v1776, %v1776
    %v1809 = vmul.f32 %v1777, %v1777
    %v1810 = vmul.f32 %v1778, %v1778
    %v1811 = vmul.f32 %v1779, %v1779
    %v1812 = vmul.f32 %v1780, %v1780
    %v1813 = vmul.f32 %v1781, %v1781
    %v1814 = vmul.f32 %v1782, %v1782
    %v1815 = vmul.f32 %v1783, %v1783
    %v1816 = vmul.f32 %v1784, %v1784
    %v1817 = vmul.f32 %v1785, %v1785
    %v1818 = vmul.f32 %v1786, %v1786
    %v1819 = vmul.f32 %v1787, %v1787
    %v1820 = vmul.f32 %v1788, %v1788
    %v1821 = vmul.f32 %v1789, %v1789
    %v1822 = vmul.f32 %v1790, %v1790
    %v1823 = vmul.f32 %v1791, %v1791
    %v1824 = vmul.f32 %v1792, %v1792
    %v1825 = vmul.f32 %v1793, %v1793
    %v1826 = vmul.f32 %v1794, %v1794
    %v1827 = vmul.f32 %v1795, %v1795
    %v1828 = vmul.f32 %v1796, %v1796
    %v1829 = vmul.f32 %v1797, %v1797
    %v1830 = vmul.f32 %v1798, %v1798
    %v1831 = vmul.f32 %v1799, %v1799
    %v1832 = vadd.f32 %v1800, %v1802
    %v1833 = vadd.f32 %v1832, %v1804
    %v1834 = vadd.f32 %v1833, %v1806
    %v1835 = vadd.f32 %v1834, %v1808
    %v1836 = vadd.f32 %v1835, %v1810
    %v1837 = vadd.f32 %v1836, %v1812
    %v1838 = vadd.f32 %v1837, %v1814
    %v1839 = vadd.f32 %v1838, %v1816
    %v1840 = vadd.f32 %v1839, %v1818
    %v1841 = vadd.f32 %v1840, %v1820
    %v1842 = vadd.f32 %v1841, %v1822
    %v1843 = vadd.f32 %v1842, %v1824
    %v1844 = vadd.f32 %v1843, %v1826
    %v1845 = vadd.f32 %v1844, %v1828
    %v1846 = vadd.f32 %v1845, %v1830
    %v1847 = vrot.slane %v1846, 4
    %v1848 = vadd.f32 %v1846, %v1847
    %v1849 = vrot.slane %v1848, 2
    %v1850 = vadd.f32 %v1848, %v1849
    %v1851 = vrot.slane %v1850, 1
    %v1852 = vadd.f32 %v1850, %v1851
    %v1853 = vadd.f32 %v1801, %v1803
    %v1854 = vadd.f32 %v1853, %v1805
    %v1855 = vadd.f32 %v1854, %v1807
    %v1856 = vadd.f32 %v1855, %v1809
    %v1857 = vadd.f32 %v1856, %v1811
    %v1858 = vadd.f32 %v1857, %v1813
    %v1859 = vadd.f32 %v1858, %v1815
    %v1860 = vadd.f32 %v1859, %v1817
    %v1861 = vadd.f32 %v1860, %v1819
    %v1862 = vadd.f32 %v1861, %v1821
    %v1863 = vadd.f32 %v1862, %v1823
    %v1864 = vadd.f32 %v1863, %v1825
    %v1865 = vadd.f32 %v1864, %v1827
    %v1866 = vadd.f32 %v1865, %v1829
    %v1867 = vadd.f32 %v1866, %v1831
    %v1868 = vrot.slane %v1867, 4
    %v1869 = vadd.f32 %v1867, %v1868
    %v1870 = vrot.slane %v1869, 2
    %v1871 = vadd.f32 %v1869, %v1870
    %v1872 = vrot.slane %v1871, 1
    %v1873 = vadd.f32 %v1871, %v1872
    %v1874 = vmul.f32 %v1852, %v446
    %v1875 = vmul.f32 %v1873, %v446
    %v1876 = vadd.f32 %v1874, 1e-05
    %v1877 = vadd.f32 %v1875, 1e-05
    %v1878 = vrsqrt.pop %v1876
    %v1879 = vrsqrt.pop %v1877
    %v1882 = vcombine.low %v1878, %v1879
    %v1884 = vunpack.c.l.s4 1966171168
    %v1885 = vunpack.c.0.s8 %v1884
    %v1886 = vlaneseq
    %v1887 = vshrl.u32 %v1886, 7
    %v1888 = vsub.s32 %v1885, %v1887
    %v1889 = vrot.slane %v1882, %v1888
    %v1891 = vunpack.c.l.s4 1966171168
    %v1892 = vunpack.c.0.s8 %v1891
    %v1893 = vlaneseq
    %v1894 = vshrl.u32 %v1893, 7
    %v1895 = vsub.s32 %v1892, %v1894
    %v1896 = vrot.slane %v1889, %v1895
    %v1898 = vmul.f32 %v1722, %v1896
    %v1900 = vlaneseq
    %v1901 = vshrl.u32 %v1900, 7
    %v1902 = vsub.s32 0, %v1901
    %v1903 = vrot.slane %v1898, %v1902
    %v1904 = vlaneseq
    %v1905 = vshrl.u32 %v1904, 7
    %v1906 = vsub.s32 1, %v1905
    %v1907 = vrot.slane %v1898, %v1906
    %v1910 = vmul.f32 %v1768, %v1903
    %v1911 = vmul.f32 %v1769, %v1907
    %v1912 = vmul.f32 %v1770, %v1903
    %v1913 = vmul.f32 %v1771, %v1907
    %v1914 = vmul.f32 %v1772, %v1903
    %v1915 = vmul.f32 %v1773, %v1907
    %v1916 = vmul.f32 %v1774, %v1903
    %v1917 = vmul.f32 %v1775, %v1907
    %v1918 = vmul.f32 %v1776, %v1903
    %v1919 = vmul.f32 %v1777, %v1907
    %v1920 = vmul.f32 %v1778, %v1903
    %v1921 = vmul.f32 %v1779, %v1907
    %v1922 = vmul.f32 %v1780, %v1903
    %v1923 = vmul.f32 %v1781, %v1907
    %v1924 = vmul.f32 %v1782, %v1903
    %v1925 = vmul.f32 %v1783, %v1907
    %v1926 = vmul.f32 %v1784, %v1903
    %v1927 = vmul.f32 %v1785, %v1907
    %v1928 = vmul.f32 %v1786, %v1903
    %v1929 = vmul.f32 %v1787, %v1907
    %v1930 = vmul.f32 %v1788, %v1903
    %v1931 = vmul.f32 %v1789, %v1907
    %v1932 = vmul.f32 %v1790, %v1903
    %v1933 = vmul.f32 %v1791, %v1907
    %v1934 = vmul.f32 %v1792, %v1903
    %v1935 = vmul.f32 %v1793, %v1907
    %v1936 = vmul.f32 %v1794, %v1903
    %v1937 = vmul.f32 %v1795, %v1907
    %v1938 = vmul.f32 %v1796, %v1903
    %v1939 = vmul.f32 %v1797, %v1907
    %v1940 = vmul.f32 %v1798, %v1903
    %v1941 = vmul.f32 %v1799, %v1907
    %v1943 = vlaneseq
    %v1944 = vshrl.u32 %v1943, 7
    %v1945 = vsub.s32 0, %v1944
    %v1946 = vrot.slane %v1723, %v1945
    %v1947 = vlaneseq
    %v1948 = vshrl.u32 %v1947, 7
    %v1949 = vsub.s32 1, %v1948
    %v1950 = vrot.slane %v1723, %v1949
    %v1953 = vadd.f32 %v1910, %v1946
    %v1954 = vadd.f32 %v1911, %v1950
    %v1955 = vadd.f32 %v1912, %v1946
    %v1956 = vadd.f32 %v1913, %v1950
    %v1957 = vadd.f32 %v1914, %v1946
    %v1958 = vadd.f32 %v1915, %v1950
    %v1959 = vadd.f32 %v1916, %v1946
    %v1960 = vadd.f32 %v1917, %v1950
    %v1961 = vadd.f32 %v1918, %v1946
    %v1962 = vadd.f32 %v1919, %v1950
    %v1963 = vadd.f32 %v1920, %v1946
    %v1964 = vadd.f32 %v1921, %v1950
    %v1965 = vadd.f32 %v1922, %v1946
    %v1966 = vadd.f32 %v1923, %v1950
    %v1967 = vadd.f32 %v1924, %v1946
    %v1968 = vadd.f32 %v1925, %v1950
    %v1969 = vadd.f32 %v1926, %v1946
    %v1970 = vadd.f32 %v1927, %v1950
    %v1971 = vadd.f32 %v1928, %v1946
    %v1972 = vadd.f32 %v1929, %v1950
    %v1973 = vadd.f32 %v1930, %v1946
    %v1974 = vadd.f32 %v1931, %v1950
    %v1975 = vadd.f32 %v1932, %v1946
    %v1976 = vadd.f32 %v1933, %v1950
    %v1977 = vadd.f32 %v1934, %v1946
    %v1978 = vadd.f32 %v1935, %v1950
    %v1979 = vadd.f32 %v1936, %v1946
    %v1980 = vadd.f32 %v1937, %v1950
    %v1981 = vadd.f32 %v1938, %v1946
    %v1982 = vadd.f32 %v1939, %v1950
    %v1983 = vadd.f32 %v1940, %v1946
    %v1984 = vadd.f32 %v1941, %v1950
    %v1985 = vsub.f32 0.0, %v1953
    %v1986 = vsub.f32 0.0, %v1954
    %v1987 = vsub.f32 0.0, %v1955
    %v1988 = vsub.f32 0.0, %v1956
    %v1989 = vsub.f32 0.0, %v1957
    %v1990 = vsub.f32 0.0, %v1958
    %v1991 = vsub.f32 0.0, %v1959
    %v1992 = vsub.f32 0.0, %v1960
    %v1993 = vsub.f32 0.0, %v1961
    %v1994 = vsub.f32 0.0, %v1962
    %v1995 = vsub.f32 0.0, %v1963
    %v1996 = vsub.f32 0.0, %v1964
    %v1997 = vsub.f32 0.0, %v1965
    %v1998 = vsub.f32 0.0, %v1966
    %v1999 = vsub.f32 0.0, %v1967
    %v2000 = vsub.f32 0.0, %v1968
    %v2001 = vsub.f32 0.0, %v1969
    %v2002 = vsub.f32 0.0, %v1970
    %v2003 = vsub.f32 0.0, %v1971
    %v2004 = vsub.f32 0.0, %v1972
    %v2005 = vsub.f32 0.0, %v1973
    %v2006 = vsub.f32 0.0, %v1974
    %v2007 = vsub.f32 0.0, %v1975
    %v2008 = vsub.f32 0.0, %v1976
    %v2009 = vsub.f32 0.0, %v1977
    %v2010 = vsub.f32 0.0, %v1978
    %v2011 = vsub.f32 0.0, %v1979
    %v2012 = vsub.f32 0.0, %v1980
    %v2013 = vsub.f32 0.0, %v1981
    %v2014 = vsub.f32 0.0, %v1982
    %v2015 = vsub.f32 0.0, %v1983
    %v2016 = vsub.f32 0.0, %v1984
    %v2017 = vmul.f32 %v1985, 1.442695
    %v2018 = vpow.pop %v2017
    %v2019 = vmul.f32 %v1986, 1.442695
    %v2020 = vpow.pop %v2019
    %v2021 = vmul.f32 %v1987, 1.442695
    %v2022 = vpow.pop %v2021
    %v2023 = vmul.f32 %v1988, 1.442695
    %v2024 = vpow.pop %v2023
    %v2025 = vmul.f32 %v1989, 1.442695
    %v2026 = vpow.pop %v2025
    %v2027 = vmul.f32 %v1990, 1.442695
    %v2028 = vpow.pop %v2027
    %v2029 = vmul.f32 %v1991, 1.442695
    %v2030 = vpow.pop %v2029
    %v2031 = vmul.f32 %v1992, 1.442695
    %v2032 = vpow.pop %v2031
    %v2033 = vmul.f32 %v1993, 1.442695
    %v2034 = vpow.pop %v2033
    %v2035 = vmul.f32 %v1994, 1.442695
    %v2036 = vpow.pop %v2035
    %v2037 = vmul.f32 %v1995, 1.442695
    %v2038 = vpow.pop %v2037
    %v2039 = vmul.f32 %v1996, 1.442695
    %v2040 = vpow.pop %v2039
    %v2041 = vmul.f32 %v1997, 1.442695
    %v2042 = vpow.pop %v2041
    %v2043 = vmul.f32 %v1998, 1.442695
    %v2044 = vpow.pop %v2043
    %v2045 = vmul.f32 %v1999, 1.442695
    %v2046 = vpow.pop %v2045
    %v2047 = vmul.f32 %v2000, 1.442695
    %v2048 = vpow.pop %v2047
    %v2049 = vmul.f32 %v2001, 1.442695
    %v2050 = vpow.pop %v2049
    %v2051 = vmul.f32 %v2002, 1.442695
    %v2052 = vpow.pop %v2051
    %v2053 = vmul.f32 %v2003, 1.442695
    %v2054 = vpow.pop %v2053
    %v2055 = vmul.f32 %v2004, 1.442695
    %v2056 = vpow.pop %v2055
    %v2057 = vmul.f32 %v2005, 1.442695
    %v2058 = vpow.pop %v2057
    %v2059 = vmul.f32 %v2006, 1.442695
    %v2060 = vpow.pop %v2059
    %v2061 = vmul.f32 %v2007, 1.442695
    %v2062 = vpow.pop %v2061
    %v2063 = vmul.f32 %v2008, 1.442695
    %v2064 = vpow.pop %v2063
    %v2065 = vmul.f32 %v2009, 1.442695
    %v2066 = vpow.pop %v2065
    %v2067 = vmul.f32 %v2010, 1.442695
    %v2068 = vpow.pop %v2067
    %v2069 = vmul.f32 %v2011, 1.442695
    %v2070 = vpow.pop %v2069
    %v2071 = vmul.f32 %v2012, 1.442695
    %v2072 = vpow.pop %v2071
    %v2073 = vmul.f32 %v2013, 1.442695
    %v2074 = vpow.pop %v2073
    %v2075 = vmul.f32 %v2014, 1.442695
    %v2076 = vpow.pop %v2075
    %v2077 = vmul.f32 %v2015, 1.442695
    %v2078 = vpow.pop %v2077
    %v2079 = vmul.f32 %v2016, 1.442695
    %v2080 = vpow.pop %v2079
    %v2081 = vadd.f32 %v2018, 1.0
    %v2082 = vadd.f32 %v2020, 1.0
    %v2083 = vadd.f32 %v2022, 1.0
    %v2084 = vadd.f32 %v2024, 1.0
    %v2085 = vadd.f32 %v2026, 1.0
    %v2086 = vadd.f32 %v2028, 1.0
    %v2087 = vadd.f32 %v2030, 1.0
    %v2088 = vadd.f32 %v2032, 1.0
    %v2089 = vadd.f32 %v2034, 1.0
    %v2090 = vadd.f32 %v2036, 1.0
    %v2091 = vadd.f32 %v2038, 1.0
    %v2092 = vadd.f32 %v2040, 1.0
    %v2093 = vadd.f32 %v2042, 1.0
    %v2094 = vadd.f32 %v2044, 1.0
    %v2095 = vadd.f32 %v2046, 1.0
    %v2096 = vadd.f32 %v2048, 1.0
    %v2097 = vadd.f32 %v2050, 1.0
    %v2098 = vadd.f32 %v2052, 1.0
    %v2099 = vadd.f32 %v2054, 1.0
    %v2100 = vadd.f32 %v2056, 1.0
    %v2101 = vadd.f32 %v2058, 1.0
    %v2102 = vadd.f32 %v2060, 1.0
    %v2103 = vadd.f32 %v2062, 1.0
    %v2104 = vadd.f32 %v2064, 1.0
    %v2105 = vadd.f32 %v2066, 1.0
    %v2106 = vadd.f32 %v2068, 1.0
    %v2107 = vadd.f32 %v2070, 1.0
    %v2108 = vadd.f32 %v2072, 1.0
    %v2109 = vadd.f32 %v2074, 1.0
    %v2110 = vadd.f32 %v2076, 1.0
    %v2111 = vadd.f32 %v2078, 1.0
    %v2112 = vadd.f32 %v2080, 1.0
    %v2113 = vrcp.pop %v2081
    %v2114 = vrcp.pop %v2082
    %v2115 = vrcp.pop %v2083
    %v2116 = vrcp.pop %v2084
    %v2117 = vrcp.pop %v2085
    %v2118 = vrcp.pop %v2086
    %v2119 = vrcp.pop %v2087
    %v2120 = vrcp.pop %v2088
    %v2121 = vrcp.pop %v2089
    %v2122 = vrcp.pop %v2090
    %v2123 = vrcp.pop %v2091
    %v2124 = vrcp.pop %v2092
    %v2125 = vrcp.pop %v2093
    %v2126 = vrcp.pop %v2094
    %v2127 = vrcp.pop %v2095
    %v2128 = vrcp.pop %v2096
    %v2129 = vrcp.pop %v2097
    %v2130 = vrcp.pop %v2098
    %v2131 = vrcp.pop %v2099
    %v2132 = vrcp.pop %v2100
    %v2133 = vrcp.pop %v2101
    %v2134 = vrcp.pop %v2102
    %v2135 = vrcp.pop %v2103
    %v2136 = vrcp.pop %v2104
    %v2137 = vrcp.pop %v2105
    %v2138 = vrcp.pop %v2106
    %v2139 = vrcp.pop %v2107
    %v2140 = vrcp.pop %v2108
    %v2141 = vrcp.pop %v2109
    %v2142 = vrcp.pop %v2110
    %v2143 = vrcp.pop %v2111
    %v2144 = vrcp.pop %v2112
    %v2145 = vmul.f32 %v1953, %v2113
    %v2146 = vmul.f32 %v1954, %v2114
    %v2147 = vmul.f32 %v1955, %v2115
    %v2148 = vmul.f32 %v1956, %v2116
    %v2149 = vmul.f32 %v1957, %v2117
    %v2150 = vmul.f32 %v1958, %v2118
    %v2151 = vmul.f32 %v1959, %v2119
    %v2152 = vmul.f32 %v1960, %v2120
    %v2153 = vmul.f32 %v1961, %v2121
    %v2154 = vmul.f32 %v1962, %v2122
    %v2155 = vmul.f32 %v1963, %v2123
    %v2156 = vmul.f32 %v1964, %v2124
    %v2157 = vmul.f32 %v1965, %v2125
    %v2158 = vmul.f32 %v1966, %v2126
    %v2159 = vmul.f32 %v1967, %v2127
    %v2160 = vmul.f32 %v1968, %v2128
    %v2161 = vmul.f32 %v1969, %v2129
    %v2162 = vmul.f32 %v1970, %v2130
    %v2163 = vmul.f32 %v1971, %v2131
    %v2164 = vmul.f32 %v1972, %v2132
    %v2165 = vmul.f32 %v1973, %v2133
    %v2166 = vmul.f32 %v1974, %v2134
    %v2167 = vmul.f32 %v1975, %v2135
    %v2168 = vmul.f32 %v1976, %v2136
    %v2169 = vmul.f32 %v1977, %v2137
    %v2170 = vmul.f32 %v1978, %v2138
    %v2171 = vmul.f32 %v1979, %v2139
    %v2172 = vmul.f32 %v1980, %v2140
    %v2173 = vmul.f32 %v1981, %v2141
    %v2174 = vmul.f32 %v1982, %v2142
    %v2175 = vmul.f32 %v1983, %v2143
    %v2176 = vmul.f32 %v1984, %v2144
    %v2177 = vpack.c.bf16 %v2147, %v2145
    %v2178 = vpack.c.bf16 %v2148, %v2146
    %v2179 = vpack.c.bf16 %v2151, %v2149
    %v2180 = vpack.c.bf16 %v2152, %v2150
    %v2181 = vpack.c.bf16 %v2155, %v2153
    %v2182 = vpack.c.bf16 %v2156, %v2154
    %v2183 = vpack.c.bf16 %v2159, %v2157
    %v2184 = vpack.c.bf16 %v2160, %v2158
    %v2185 = vpack.c.bf16 %v2163, %v2161
    %v2186 = vpack.c.bf16 %v2164, %v2162
    %v2187 = vpack.c.bf16 %v2167, %v2165
    %v2188 = vpack.c.bf16 %v2168, %v2166
    %v2189 = vpack.c.bf16 %v2171, %v2169
    %v2190 = vpack.c.bf16 %v2172, %v2170
    %v2191 = vpack.c.bf16 %v2175, %v2173
    %v2192 = vpack.c.bf16 %v2176, %v2174
    %v2193 = vld [vmem:[#allocation14] sm:$0xf]
    %v2194 = vld [vmem:[#allocation14 + $0x4] sm:$0xf]
    %v2195 = vld [vmem:[#allocation14 + $0x8] sm:$0xf]
    %v2196 = vld [vmem:[#allocation14 + $0xc] sm:$0xf]
    %v2197 = vld [vmem:[#allocation14 + $0x10] sm:$0xf]
    %v2198 = vld [vmem:[#allocation14 + $0x14] sm:$0xf]
    %v2199 = vld [vmem:[#allocation14 + $0x18] sm:$0xf]
    %v2200 = vld [vmem:[#allocation14 + $0x1c] sm:$0xf]
    %v2201 = vld [vmem:[#allocation14 + $0x20] sm:$0xf]
    %v2202 = vld [vmem:[#allocation14 + $0x24] sm:$0xf]
    %v2203 = vld [vmem:[#allocation14 + $0x28] sm:$0xf]
    %v2204 = vld [vmem:[#allocation14 + $0x2c] sm:$0xf]
    %v2205 = vld [vmem:[#allocation14 + $0x30] sm:$0xf]
    %v2206 = vld [vmem:[#allocation14 + $0x34] sm:$0xf]
    %v2207 = vld [vmem:[#allocation14 + $0x38] sm:$0xf]
    %v2208 = vld [vmem:[#allocation14 + $0x3c] sm:$0xf]
    %v2209 = vld [vmem:[#allocation14 + $0x40] sm:$0xf]
    %v2210 = vld [vmem:[#allocation14 + $0x44] sm:$0xf]
    %v2211 = vld [vmem:[#allocation14 + $0x48] sm:$0xf]
    %v2212 = vld [vmem:[#allocation14 + $0x4c] sm:$0xf]
    %v2213 = vld [vmem:[#allocation14 + $0x50] sm:$0xf]
    %v2214 = vld [vmem:[#allocation14 + $0x54] sm:$0xf]
    %v2215 = vld [vmem:[#allocation14 + $0x58] sm:$0xf]
    %v2216 = vld [vmem:[#allocation14 + $0x5c] sm:$0xf]
    %v2217 = vld [vmem:[#allocation14 + $0x60] sm:$0xf]
    %v2218 = vld [vmem:[#allocation14 + $0x64] sm:$0xf]
    %v2219 = vld [vmem:[#allocation14 + $0x68] sm:$0xf]
    %v2220 = vld [vmem:[#allocation14 + $0x6c] sm:$0xf]
    %v2221 = vld [vmem:[#allocation14 + $0x70] sm:$0xf]
    %v2222 = vld [vmem:[#allocation14 + $0x74] sm:$0xf]
    %v2223 = vld [vmem:[#allocation14 + $0x78] sm:$0xf]
    %v2224 = vld [vmem:[#allocation14 + $0x7c] sm:$0xf]
    %v2257 = vunpack.c.l.b16 %v2193
    %v2258 = vunpack.c.l.b16 %v2194
    %v2259 = vunpack.c.l.b16 %v2195
    %v2260 = vunpack.c.l.b16 %v2196
    %v2261 = vunpack.c.l.b16 %v2197
    %v2262 = vunpack.c.l.b16 %v2198
    %v2263 = vunpack.c.l.b16 %v2199
    %v2264 = vunpack.c.l.b16 %v2200
    %v2265 = vunpack.c.l.b16 %v2201
    %v2266 = vunpack.c.l.b16 %v2202
    %v2267 = vunpack.c.l.b16 %v2203
    %v2268 = vunpack.c.l.b16 %v2204
    %v2269 = vunpack.c.l.b16 %v2205
    %v2270 = vunpack.c.l.b16 %v2206
    %v2271 = vunpack.c.l.b16 %v2207
    %v2272 = vunpack.c.l.b16 %v2208
    %v2273 = vunpack.c.l.b16 %v2209
    %v2274 = vunpack.c.l.b16 %v2210
    %v2275 = vunpack.c.l.b16 %v2211
    %v2276 = vunpack.c.l.b16 %v2212
    %v2277 = vunpack.c.l.b16 %v2213
    %v2278 = vunpack.c.l.b16 %v2214
    %v2279 = vunpack.c.l.b16 %v2215
    %v2280 = vunpack.c.l.b16 %v2216
    %v2281 = vunpack.c.l.b16 %v2217
    %v2282 = vunpack.c.l.b16 %v2218
    %v2283 = vunpack.c.l.b16 %v2219
    %v2284 = vunpack.c.l.b16 %v2220
    %v2285 = vunpack.c.l.b16 %v2221
    %v2286 = vunpack.c.l.b16 %v2222
    %v2287 = vunpack.c.l.b16 %v2223
    %v2288 = vunpack.c.l.b16 %v2224
    %v2289 = vpack.c.b16 %v2258, %v2257
    %v2290 = vpack.c.b16 %v2260, %v2259
    %v2291 = vpack.c.b16 %v2262, %v2261
    %v2292 = vpack.c.b16 %v2264, %v2263
    %v2293 = vpack.c.b16 %v2266, %v2265
    %v2294 = vpack.c.b16 %v2268, %v2267
    %v2295 = vpack.c.b16 %v2270, %v2269
    %v2296 = vpack.c.b16 %v2272, %v2271
    %v2297 = vpack.c.b16 %v2274, %v2273
    %v2298 = vpack.c.b16 %v2276, %v2275
    %v2299 = vpack.c.b16 %v2278, %v2277
    %v2300 = vpack.c.b16 %v2280, %v2279
    %v2301 = vpack.c.b16 %v2282, %v2281
    %v2302 = vpack.c.b16 %v2284, %v2283
    %v2303 = vpack.c.b16 %v2286, %v2285
    %v2304 = vpack.c.b16 %v2288, %v2287
    %2321 = vmatprep.subr.bf16.mxu0 0
    %2322 = vmatpush1.bf16.msra.mxu0 %v2289
    %2323 = vmatprep.subr.bf16.mxu0 0
    %2324 = vmatpush1.bf16.msra.mxu0 %v2290
    %2325 = vmatprep.subr.bf16.mxu0 0
    %2326 = vmatpush1.bf16.msra.mxu0 %v2291
    %2327 = vmatprep.subr.bf16.mxu0 0
    %2328 = vmatpush1.bf16.msra.mxu0 %v2292
    %2329 = vmatprep.subr.bf16.mxu0 0
    %2330 = vmatpush1.bf16.msra.mxu0 %v2293
    %2331 = vmatprep.subr.bf16.mxu0 0
    %2332 = vmatpush1.bf16.msra.mxu0 %v2294
    %2333 = vmatprep.subr.bf16.mxu0 0
    %2334 = vmatpush1.bf16.msra.mxu0 %v2295
    %2335 = vmatprep.subr.bf16.mxu0 0
    %2336 = vmatpush1.bf16.msra.mxu0 %v2296
    %2337 = vmatprep.subr.bf16.mxu0 0
    %2338 = vmatpush1.bf16.msra.mxu0 %v2297
    %2339 = vmatprep.subr.bf16.mxu0 0
    %2340 = vmatpush1.bf16.msra.mxu0 %v2298
    %2341 = vmatprep.subr.bf16.mxu0 0
    %2342 = vmatpush1.bf16.msra.mxu0 %v2299
    %2343 = vmatprep.subr.bf16.mxu0 0
    %2344 = vmatpush1.bf16.msra.mxu0 %v2300
    %2345 = vmatprep.subr.bf16.mxu0 0
    %2346 = vmatpush1.bf16.msra.mxu0 %v2301
    %2347 = vmatprep.subr.bf16.mxu0 0
    %2348 = vmatpush1.bf16.msra.mxu0 %v2302
    %2349 = vmatprep.subr.bf16.mxu0 0
    %2350 = vmatpush1.bf16.msra.mxu0 %v2303
    %2351 = vmatprep.subr.bf16.mxu0 0
    %2352 = vmatpush1.bf16.msra.mxu0 %v2304
    %2353 = vmatprep.mubr.bf16.mxu0 %v2178
    %2354 = vmatmul.mubr.bf16.gmra.mrb[0].mxu0 %v2177
    %v2355 = vpop.f32.mrb[0].mxu0
    %v2356 = vadd.f32 0.0, %v2355
    %v2357 = vpop.f32.mrb[0].mxu0
    %v2358 = vpop.f32.mrb[0].mxu0
    %v2359 = vadd.f32 0.0, %v2358
    %v2360 = vpop.f32.mrb[0].mxu0
    %2361 = vmatprep.mubr.bf16.mxu0 %v2180
    %2362 = vmatmul.mubr.bf16.gmra.mrb[0].mxu0 %v2179
    %v2363 = vpop.f32.mrb[0].mxu0
    %v2364 = vadd.f32 0.0, %v2363
    %v2365 = vpop.f32.mrb[0].mxu0
    %v2366 = vpop.f32.mrb[0].mxu0
    %v2367 = vadd.f32 0.0, %v2366
    %v2368 = vpop.f32.mrb[0].mxu0
    %2369 = vmatprep.mubr.bf16.mxu0 %v2182
    %2370 = vmatmul.mubr.bf16.gmra.mrb[0].mxu0 %v2181
    %v2371 = vpop.f32.mrb[0].mxu0
    %v2372 = vadd.f32 0.0, %v2371
    %v2373 = vpop.f32.mrb[0].mxu0
    %v2374 = vpop.f32.mrb[0].mxu0
    %v2375 = vadd.f32 0.0, %v2374
    %v2376 = vpop.f32.mrb[0].mxu0
    %2377 = vmatprep.mubr.bf16.mxu0 %v2184
    %2378 = vmatmul.mubr.bf16.gmra.mrb[0].mxu0 %v2183
    %v2379 = vpop.f32.mrb[0].mxu0
    %v2380 = vadd.f32 0.0, %v2379
    %v2381 = vpop.f32.mrb[0].mxu0
    %v2382 = vpop.f32.mrb[0].mxu0
    %v2383 = vadd.f32 0.0, %v2382
    %v2384 = vpop.f32.mrb[0].mxu0
    %2385 = vmatprep.mubr.bf16.mxu0 %v2186
    %2386 = vmatmul.mubr.bf16.gmra.mrb[0].mxu0 %v2185
    %v2387 = vpop.f32.mrb[0].mxu0
    %v2388 = vadd.f32 0.0, %v2387
    %v2389 = vpop.f32.mrb[0].mxu0
    %v2390 = vpop.f32.mrb[0].mxu0
    %v2391 = vadd.f32 0.0, %v2390
    %v2392 = vpop.f32.mrb[0].mxu0
    %2393 = vmatprep.mubr.bf16.mxu0 %v2188
    %2394 = vmatmul.mubr.bf16.gmra.mrb[0].mxu0 %v2187
    %v2395 = vpop.f32.mrb[0].mxu0
    %v2396 = vadd.f32 0.0, %v2395
    %v2397 = vpop.f32.mrb[0].mxu0
    %v2398 = vpop.f32.mrb[0].mxu0
    %v2399 = vadd.f32 0.0, %v2398
    %v2400 = vpop.f32.mrb[0].mxu0
    %2401 = vmatprep.mubr.bf16.mxu0 %v2190
    %2402 = vmatmul.mubr.bf16.gmra.mrb[0].mxu0 %v2189
    %v2403 = vpop.f32.mrb[0].mxu0
    %v2404 = vadd.f32 0.0, %v2403
    %v2405 = vpop.f32.mrb[0].mxu0
    %v2406 = vpop.f32.mrb[0].mxu0
    %v2407 = vadd.f32 0.0, %v2406
    %v2408 = vpop.f32.mrb[0].mxu0
    %2409 = vmatprep.mubr.bf16.mxu0 %v2192
    %2410 = vmatmul.mubr.bf16.gmra.mrb[0].mxu0 %v2191
    %v2411 = vpop.f32.mrb[0].mxu0
    %v2412 = vadd.f32 0.0, %v2411
    %v2413 = vpop.f32.mrb[0].mxu0
    %v2414 = vpop.f32.mrb[0].mxu0
    %v2415 = vadd.f32 0.0, %v2414
    %v2416 = vpop.f32.mrb[0].mxu0
    %2417 = vdwg.mxu0
    %v2418 = vld [vmem:[#allocation16] sm:$0x1]
    %v2419 = vld [vmem:[#allocation17] sm:$0x1]
    %v2420 = vsel %vm264, %v2356, 0.0
    %v2421 = vsel %vm264, %v2359, 0.0
    %v2422 = vadd.f32 %v2420, %v2421
    %v2423 = vsel %vm264, %v2364, 0.0
    %v2424 = vadd.f32 %v2422, %v2423
    %v2425 = vsel %vm264, %v2367, 0.0
    %v2426 = vadd.f32 %v2424, %v2425
    %v2427 = vsel %vm264, %v2372, 0.0
    %v2428 = vadd.f32 %v2426, %v2427
    %v2429 = vsel %vm264, %v2375, 0.0
    %v2430 = vadd.f32 %v2428, %v2429
    %v2431 = vsel %vm264, %v2380, 0.0
    %v2432 = vadd.f32 %v2430, %v2431
    %v2433 = vsel %vm264, %v2383, 0.0
    %v2434 = vadd.f32 %v2432, %v2433
    %v2435 = vsel %vm264, %v2388, 0.0
    %v2436 = vadd.f32 %v2434, %v2435
    %v2437 = vsel %vm264, %v2391, 0.0
    %v2438 = vadd.f32 %v2436, %v2437
    %v2439 = vsel %vm264, %v2396, 0.0
    %v2440 = vadd.f32 %v2438, %v2439
    %v2441 = vsel %vm264, %v2399, 0.0
    %v2442 = vadd.f32 %v2440, %v2441
    %v2443 = vsel %vm264, %v2404, 0.0
    %v2444 = vadd.f32 %v2442, %v2443
    %v2445 = vsel %vm264, %v2407, 0.0
    %v2446 = vadd.f32 %v2444, %v2445
    %v2447 = vsel %vm264, %v2412, 0.0
    %v2448 = vadd.f32 %v2446, %v2447
    %v2449 = vsel %vm264, %v2415, 0.0
    %v2450 = vadd.f32 %v2448, %v2449
    %v2451 = vrot.slane %v2450, 4
    %v2452 = vadd.f32 %v2450, %v2451
    %v2453 = vrot.slane %v2452, 2
    %v2454 = vadd.f32 %v2452, %v2453
    %v2455 = vrot.slane %v2454, 1
    %v2456 = vadd.f32 %v2454, %v2455
    %v2457 = vmul.f32 %v2456, %v446
    %v2458 = vsub.f32 %v2356, %v2457
    %v2459 = vsub.f32 %v2359, %v2457
    %v2460 = vsub.f32 %v2364, %v2457
    %v2461 = vsub.f32 %v2367, %v2457
    %v2462 = vsub.f32 %v2372, %v2457
    %v2463 = vsub.f32 %v2375, %v2457
    %v2464 = vsub.f32 %v2380, %v2457
    %v2465 = vsub.f32 %v2383, %v2457
    %v2466 = vsub.f32 %v2388, %v2457
    %v2467 = vsub.f32 %v2391, %v2457
    %v2468 = vsub.f32 %v2396, %v2457
    %v2469 = vsub.f32 %v2399, %v2457
    %v2470 = vsub.f32 %v2404, %v2457
    %v2471 = vsub.f32 %v2407, %v2457
    %v2472 = vsub.f32 %v2412, %v2457
    %v2473 = vsub.f32 %v2415, %v2457
    %v2474 = vmul.f32 %v2458, %v2458
    %v2475 = vmul.f32 %v2459, %v2459
    %v2476 = vmul.f32 %v2460, %v2460
    %v2477 = vmul.f32 %v2461, %v2461
    %v2478 = vmul.f32 %v2462, %v2462
    %v2479 = vmul.f32 %v2463, %v2463
    %v2480 = vmul.f32 %v2464, %v2464
    %v2481 = vmul.f32 %v2465, %v2465
    %v2482 = vmul.f32 %v2466, %v2466
    %v2483 = vmul.f32 %v2467, %v2467
    %v2484 = vmul.f32 %v2468, %v2468
    %v2485 = vmul.f32 %v2469, %v2469
    %v2486 = vmul.f32 %v2470, %v2470
    %v2487 = vmul.f32 %v2471, %v2471
    %v2488 = vmul.f32 %v2472, %v2472
    %v2489 = vmul.f32 %v2473, %v2473
    %v2490 = vsel %vm264, %v2474, 0.0
    %v2491 = vsel %vm264, %v2475, 0.0
    %v2492 = vadd.f32 %v2490, %v2491
    %v2493 = vsel %vm264, %v2476, 0.0
    %v2494 = vadd.f32 %v2492, %v2493
    %v2495 = vsel %vm264, %v2477, 0.0
    %v2496 = vadd.f32 %v2494, %v2495
    %v2497 = vsel %vm264, %v2478, 0.0
    %v2498 = vadd.f32 %v2496, %v2497
    %v2499 = vsel %vm264, %v2479, 0.0
    %v2500 = vadd.f32 %v2498, %v2499
    %v2501 = vsel %vm264, %v2480, 0.0
    %v2502 = vadd.f32 %v2500, %v2501
    %v2503 = vsel %vm264, %v2481, 0.0
    %v2504 = vadd.f32 %v2502, %v2503
    %v2505 = vsel %vm264, %v2482, 0.0
    %v2506 = vadd.f32 %v2504, %v2505
    %v2507 = vsel %vm264, %v2483, 0.0
    %v2508 = vadd.f32 %v2506, %v2507
    %v2509 = vsel %vm264, %v2484, 0.0
    %v2510 = vadd.f32 %v2508, %v2509
    %v2511 = vsel %vm264, %v2485, 0.0
    %v2512 = vadd.f32 %v2510, %v2511
    %v2513 = vsel %vm264, %v2486, 0.0
    %v2514 = vadd.f32 %v2512, %v2513
    %v2515 = vsel %vm264, %v2487, 0.0
    %v2516 = vadd.f32 %v2514, %v2515
    %v2517 = vsel %vm264, %v2488, 0.0
    %v2518 = vadd.f32 %v2516, %v2517
    %v2519 = vsel %vm264, %v2489, 0.0
    %v2520 = vadd.f32 %v2518, %v2519
    %v2521 = vrot.slane %v2520, 4
    %v2522 = vadd.f32 %v2520, %v2521
    %v2523 = vrot.slane %v2522, 2
    %v2524 = vadd.f32 %v2522, %v2523
    %v2525 = vrot.slane %v2524, 1
    %v2526 = vadd.f32 %v2524, %v2525
    %v2527 = vmul.f32 %v2526, %v446
    %v2528 = vadd.f32 %v2527, 1e-05
    %v2529 = vrsqrt.pop %v2528
    %v2530 = vmul.f32 %v2418, %v2529
    %v2532 = vlaneseq
    %v2533 = vshrl.u32 %v2532, 7
    %v2534 = vsub.s32 0, %v2533
    %v2535 = vrot.slane %v2530, %v2534
    %v2537 = vmul.f32 %v2458, %v2535
    %v2538 = vmul.f32 %v2459, %v2535
    %v2539 = vmul.f32 %v2460, %v2535
    %v2540 = vmul.f32 %v2461, %v2535
    %v2541 = vmul.f32 %v2462, %v2535
    %v2542 = vmul.f32 %v2463, %v2535
    %v2543 = vmul.f32 %v2464, %v2535
    %v2544 = vmul.f32 %v2465, %v2535
    %v2545 = vmul.f32 %v2466, %v2535
    %v2546 = vmul.f32 %v2467, %v2535
    %v2547 = vmul.f32 %v2468, %v2535
    %v2548 = vmul.f32 %v2469, %v2535
    %v2549 = vmul.f32 %v2470, %v2535
    %v2550 = vmul.f32 %v2471, %v2535
    %v2551 = vmul.f32 %v2472, %v2535
    %v2552 = vmul.f32 %v2473, %v2535
    %v2554 = vlaneseq
    %v2555 = vshrl.u32 %v2554, 7
    %v2556 = vsub.s32 0, %v2555
    %v2557 = vrot.slane %v2419, %v2556
    %v2559 = vadd.f32 %v2537, %v2557
    %v2560 = vadd.f32 %v2538, %v2557
    %v2561 = vadd.f32 %v2539, %v2557
    %v2562 = vadd.f32 %v2540, %v2557
    %v2563 = vadd.f32 %v2541, %v2557
    %v2564 = vadd.f32 %v2542, %v2557
    %v2565 = vadd.f32 %v2543, %v2557
    %v2566 = vadd.f32 %v2544, %v2557
    %v2567 = vadd.f32 %v2545, %v2557
    %v2568 = vadd.f32 %v2546, %v2557
    %v2569 = vadd.f32 %v2547, %v2557
    %v2570 = vadd.f32 %v2548, %v2557
    %v2571 = vadd.f32 %v2549, %v2557
    %v2572 = vadd.f32 %v2550, %v2557
    %v2573 = vadd.f32 %v2551, %v2557
    %v2574 = vadd.f32 %v2552, %v2557
    %v2575 = vsel %vm264, %v2559, 0.0
    %v2576 = vsel %vm264, %v2560, 0.0
    %v2577 = vadd.f32 %v2575, %v2576
    %v2578 = vsel %vm264, %v2561, 0.0
    %v2579 = vadd.f32 %v2577, %v2578
    %v2580 = vsel %vm264, %v2562, 0.0
    %v2581 = vadd.f32 %v2579, %v2580
    %v2582 = vsel %vm264, %v2563, 0.0
    %v2583 = vadd.f32 %v2581, %v2582
    %v2584 = vsel %vm264, %v2564, 0.0
    %v2585 = vadd.f32 %v2583, %v2584
    %v2586 = vsel %vm264, %v2565, 0.0
    %v2587 = vadd.f32 %v2585, %v2586
    %v2588 = vsel %vm264, %v2566, 0.0
    %v2589 = vadd.f32 %v2587, %v2588
    %v2590 = vrot.slane %v2589, 4
    %v2591 = vadd.f32 %v2589, %v2590
    %v2592 = vrot.slane %v2591, 2
    %v2593 = vadd.f32 %v2591, %v2592
    %v2594 = vrot.slane %v2593, 1
    %v2595 = vadd.f32 %v2593, %v2594
    %v2596 = vsel %vm264, %v2567, 0.0
    %v2597 = vsel %vm264, %v2568, 0.0
    %v2598 = vadd.f32 %v2596, %v2597
    %v2599 = vsel %vm264, %v2569, 0.0
    %v2600 = vadd.f32 %v2598, %v2599
    %v2601 = vsel %vm264, %v2570, 0.0
    %v2602 = vadd.f32 %v2600, %v2601
    %v2603 = vsel %vm264, %v2571, 0.0
    %v2604 = vadd.f32 %v2602, %v2603
    %v2605 = vsel %vm264, %v2572, 0.0
    %v2606 = vadd.f32 %v2604, %v2605
    %v2607 = vsel %vm264, %v2573, 0.0
    %v2608 = vadd.f32 %v2606, %v2607
    %v2609 = vsel %vm264, %v2574, 0.0
    %v2610 = vadd.f32 %v2608, %v2609
    %v2611 = vrot.slane %v2610, 4
    %v2612 = vadd.f32 %v2610, %v2611
    %v2613 = vrot.slane %v2612, 2
    %v2614 = vadd.f32 %v2612, %v2613
    %v2615 = vrot.slane %v2614, 1
    %v2616 = vadd.f32 %v2614, %v2615
    %v2617 = vrcp.pop 64.0
    %v2618 = vmul.f32 %v2595, %v2617
    %v2619 = vmul.f32 %v2616, %v2617
    %v2620 = vpack.c.bf16 %v2618, %v2618
    %v2621 = vpack.c.bf16 %v2619, %v2619
    %v2622 = vld [vmem:[#allocation19] sm:$0xf]
    %v2623 = vld [vmem:[#allocation19 + $0x4] sm:$0xf]
    %v2624 = vld [vmem:[#allocation19 + $0x8] sm:$0xf]
    %v2625 = vld [vmem:[#allocation19 + $0xc] sm:$0xf]
    %v2626 = vld [vmem:[#allocation19 + $0x10] sm:$0xf]
    %v2627 = vld [vmem:[#allocation19 + $0x14] sm:$0xf]
    %v2628 = vld [vmem:[#allocation19 + $0x18] sm:$0xf]
    %v2629 = vld [vmem:[#allocation19 + $0x1c] sm:$0xf]
    %v2632 = vunpack.c.l.b16 %v2620
    %v2633 = vunpack.c.l.b16 %v2621
    %vm2634 = vcmask 1041409
    %v2635 = vsel %vm2634, %v2633, %v2632
    %v2636 = vpack.c.b16 %v2635, %v2635
    %v2645 = vunpack.c.l.b16 %v2622
    %v2646 = vunpack.c.l.b16 %v2623
    %v2647 = vunpack.c.l.b16 %v2624
    %v2648 = vunpack.c.l.b16 %v2625
    %v2649 = vunpack.c.l.b16 %v2626
    %v2650 = vunpack.c.l.b16 %v2627
    %v2651 = vunpack.c.l.b16 %v2628
    %v2652 = vunpack.c.l.b16 %v2629
    %v2653 = vpack.c.b16 %v2646, %v2645
    %v2654 = vpack.c.b16 %v2648, %v2647
    %v2655 = vpack.c.b16 %v2650, %v2649
    %v2656 = vpack.c.b16 %v2652, %v2651
    %v2662 = vsel %vm264, %v2636, 0
    %2664 = vmatprep.subr.bf16.mxu0 0
    %2665 = vmatpush1.bf16.msra.mxu0 %v2653
    %2666 = vmatprep.subr.bf16.mxu0 0
    %2667 = vmatpush1.bf16.msra.mxu0 %v2654
    %2668 = vmatprep.subr.bf16.mxu0 0
    %2669 = vmatpush1.bf16.msra.mxu0 %v2655
    %2670 = vmatprep.subr.bf16.mxu0 0
    %2671 = vmatpush1.bf16.msra.mxu0 %v2656
    %2672 = vmatprep.subr.bf16.mxu0 0
    %2673 = vmatpush1.bf16.msra.mxu0 0
    %2674 = vmatprep.subr.bf16.mxu0 0
    %2675 = vmatpush1.bf16.msra.mxu0 0
    %2676 = vmatprep.subr.bf16.mxu0 0
    %2677 = vmatpush1.bf16.msra.mxu0 0
    %2678 = vmatprep.subr.bf16.mxu0 0
    %2679 = vmatpush1.bf16.msra.mxu0 0
    %2680 = vmatprep.subr.bf16.mxu0 0
    %2681 = vmatpush1.bf16.msra.mxu0 0
    %2682 = vmatprep.subr.bf16.mxu0 0
    %2683 = vmatpush1.bf16.msra.mxu0 0
    %2684 = vmatprep.subr.bf16.mxu0 0
    %2685 = vmatpush1.bf16.msra.mxu0 0
    %2686 = vmatprep.subr.bf16.mxu0 0
    %2687 = vmatpush1.bf16.msra.mxu0 0
    %2688 = vmatprep.subr.bf16.mxu0 0
    %2689 = vmatpush1.bf16.msra.mxu0 0
    %2690 = vmatprep.subr.bf16.mxu0 0
    %2691 = vmatpush1.bf16.msra.mxu0 0
    %2692 = vmatprep.subr.bf16.mxu0 0
    %2693 = vmatpush1.bf16.msra.mxu0 0
    %2694 = vmatprep.subr.bf16.mxu0 0
    %2695 = vmatpush1.bf16.msra.mxu0 0
    %2696 = vmatprep.mubr.bf16.mxu0 0
    %2697 = vmatmul.mubr.bf16.gmra.mrb[0].mxu0 %v2662
    %v2698 = vpop.f32.mrb[0].mxu0
    %v2699 = vadd.f32 0.0, %v2698
    %v2700 = vpop.f32.mrb[0].mxu0
    %v2701 = vpop.f32.mrb[0].mxu0
    %v2702 = vpop.f32.mrb[0].mxu0
    %2703 = vdwg.mxu0
    %v2704 = vmax.f32 %v2699, 0.0
    %v2705 = vpack.c.bf16 %v2704, %v2704
    %v2706 = vld [vmem:[#allocation20] sm:$0x3]
    %vm2707 = vcmask 31744
    %v2709 = vsel %vm2707, %v2705, 0
    %vm2711 = vcmask 1041408
    %v2713 = vsel %vm2711, %v2706, 0
    %2715 = vmatprep.subr.bf16.mxu0 0
    %2716 = vmatpush1.bf16.msra.mxu0 %v2713
    %2717 = vmatprep.subr.bf16.mxu0 0
    %2718 = vmatpush1.bf16.msra.mxu0 0
    %2719 = vmatprep.subr.bf16.mxu0 0
    %2720 = vmatpush1.bf16.msra.mxu0 0
    %2721 = vmatprep.subr.bf16.mxu0 0
    %2722 = vmatpush1.bf16.msra.mxu0 0
    %2723 = vmatprep.subr.bf16.mxu0 0
    %2724 = vmatpush1.bf16.msra.mxu0 0
    %2725 = vmatprep.subr.bf16.mxu0 0
    %2726 = vmatpush1.bf16.msra.mxu0 0
    %2727 = vmatprep.subr.bf16.mxu0 0
    %2728 = vmatpush1.bf16.msra.mxu0 0
    %2729 = vmatprep.subr.bf16.mxu0 0
    %2730 = vmatpush1.bf16.msra.mxu0 0
    %2731 = vmatprep.subr.bf16.mxu0 0
    %2732 = vmatpush1.bf16.msra.mxu0 0
    %2733 = vmatprep.subr.bf16.mxu0 0
    %2734 = vmatpush1.bf16.msra.mxu0 0
    %2735 = vmatprep.subr.bf16.mxu0 0
    %2736 = vmatpush1.bf16.msra.mxu0 0
    %2737 = vmatprep.subr.bf16.mxu0 0
    %2738 = vmatpush1.bf16.msra.mxu0 0
    %2739 = vmatprep.subr.bf16.mxu0 0
    %2740 = vmatpush1.bf16.msra.mxu0 0
    %2741 = vmatprep.subr.bf16.mxu0 0
    %2742 = vmatpush1.bf16.msra.mxu0 0
    %2743 = vmatprep.subr.bf16.mxu0 0
    %2744 = vmatpush1.bf16.msra.mxu0 0
    %2745 = vmatprep.subr.bf16.mxu0 0
    %2746 = vmatpush1.bf16.msra.mxu0 0
    %2747 = vmatprep.mubr.bf16.mxu0 0
    %2748 = vmatmul.mubr.bf16.gmra.mrb[0].mxu0 %v2709
    %v2749 = vpop.f32.mrb[0].mxu0
    %v2750 = vadd.f32 0.0, %v2749
    %v2751 = vpop.f32.mrb[0].mxu0
    %v2752 = vpop.f32.mrb[0].mxu0
    %v2753 = vpop.f32.mrb[0].mxu0
    %2754 = vdwg.mxu0
    %v2755 = vsub.f32 0.0, %v2750
    %v2756 = vmul.f32 %v2755, 1.442695
    %v2757 = vpow.pop %v2756
    %v2758 = vadd.f32 %v2757, 1.0
    %v2759 = vrcp.pop %v2758
    %v2762 = vunpack.c.l.s4 1966171168
    %v2763 = vunpack.c.0.s8 %v2762
    %v2764 = vlaneseq
    %v2765 = vshrl.u32 %v2764, 7
    %v2766 = vsub.s32 %v2763, %v2765
    %v2767 = vrot.slane %v2759, %v2766
    %v2768 = vcombine.high %v2767, %v2767
    %v2770 = vunpack.c.l.s4 1966171168
    %v2771 = vunpack.c.0.s8 %v2770
    %v2772 = vlaneseq
    %v2773 = vshrl.u32 %v2772, 7
    %v2774 = vsub.s32 %v2771, %v2773
    %v2775 = vrot.slane %v2767, %v2774
    %v2777 = vunpack.c.l.s4 1966171168
    %v2778 = vunpack.c.0.s8 %v2777
    %v2779 = vlaneseq
    %v2780 = vshrl.u32 %v2779, 7
    %v2781 = vsub.s32 %v2778, %v2780
    %v2782 = vrot.slane %v2768, %v2781
    %v2783 = vlaneseq
    %v2784 = vshrl.u32 %v2783, 7
    %v2785 = vsub.s32 0, %v2784
    %v2786 = vrot.slane %v2775, %v2785
    %v2787 = vlaneseq
    %v2788 = vshrl.u32 %v2787, 7
    %v2789 = vsub.s32 0, %v2788
    %v2790 = vrot.slane %v2782, %v2789
    %v2793 = vmul.f32 %v2559, %v2786
    %v2794 = vmul.f32 %v2560, %v2786
    %v2795 = vmul.f32 %v2561, %v2786
    %v2796 = vmul.f32 %v2562, %v2786
    %v2797 = vmul.f32 %v2563, %v2786
    %v2798 = vmul.f32 %v2564, %v2786
    %v2799 = vmul.f32 %v2565, %v2786
    %v2800 = vmul.f32 %v2566, %v2786
    %v2801 = vmul.f32 %v2567, %v2790
    %v2802 = vmul.f32 %v2568, %v2790
    %v2803 = vmul.f32 %v2569, %v2790
    %v2804 = vmul.f32 %v2570, %v2790
    %v2805 = vmul.f32 %v2571, %v2790
    %v2806 = vmul.f32 %v2572, %v2790
    %v2807 = vmul.f32 %v2573, %v2790
    %v2808 = vmul.f32 %v2574, %v2790
    %v2809 = vadd.f32 %v2793, %v192
    %v2810 = vadd.f32 %v2794, %v193
    %v2811 = vadd.f32 %v2795, %v194
    %v2812 = vadd.f32 %v2796, %v195
    %v2813 = vadd.f32 %v2797, %v196
    %v2814 = vadd.f32 %v2798, %v197
    %v2815 = vadd.f32 %v2799, %v198
    %v2816 = vadd.f32 %v2800, %v199
    %v2817 = vadd.f32 %v2801, %v200
    %v2818 = vadd.f32 %v2802, %v201
    %v2819 = vadd.f32 %v2803, %v202
    %v2820 = vadd.f32 %v2804, %v203
    %v2821 = vadd.f32 %v2805, %v204
    %v2822 = vadd.f32 %v2806, %v205
    %v2823 = vadd.f32 %v2807, %v206
    %v2824 = vadd.f32 %v2808, %v207
    %2825 = vst.msk [vmem:[#allocation22] sm:$0xff] %vm264, %v2809
    %2826 = vst.msk [vmem:[#allocation22 + $0x8] sm:$0xff] %vm264, %v2810
    %2827 = vst.msk [vmem:[#allocation22 + $0x10] sm:$0xff] %vm264, %v2811
    %2828 = vst.msk [vmem:[#allocation22 + $0x18] sm:$0xff] %vm264, %v2812
    %2829 = vst.msk [vmem:[#allocation22 + $0x20] sm:$0xff] %vm264, %v2813
    %2830 = vst.msk [vmem:[#allocation22 + $0x28] sm:$0xff] %vm264, %v2814
    %2831 = vst.msk [vmem:[#allocation22 + $0x30] sm:$0xff] %vm264, %v2815
    %2832 = vst.msk [vmem:[#allocation22 + $0x38] sm:$0xff] %vm264, %v2816
    %2833 = vst.msk [vmem:[#allocation22 + $0x40] sm:$0xff] %vm264, %v2817
    %2834 = vst.msk [vmem:[#allocation22 + $0x48] sm:$0xff] %vm264, %v2818
    %2835 = vst.msk [vmem:[#allocation22 + $0x50] sm:$0xff] %vm264, %v2819
    %2836 = vst.msk [vmem:[#allocation22 + $0x58] sm:$0xff] %vm264, %v2820
    %2837 = vst.msk [vmem:[#allocation22 + $0x60] sm:$0xff] %vm264, %v2821
    %2838 = vst.msk [vmem:[#allocation22 + $0x68] sm:$0xff] %vm264, %v2822
    %2839 = vst.msk [vmem:[#allocation22 + $0x70] sm:$0xff] %vm264, %v2823
    %2840 = vst.msk [vmem:[#allocation22 + $0x78] sm:$0xff] %vm264, %v2824
    // Predicated region
    $region98: #{tpu_custom_call.1} parent=1 // pred_check
      _
    $region99: #{tpu_custom_call.1} parent=1 // pred_check_branch
      %2842 = sbr.rel (0) target = $region101
    $region100: #{tpu_custom_call.1} parent=1 // pred_region
      %s2844 = ssub.s32 2048, 2048
      %2845 = vsyncadd [#allocation4], %s2844
      %s2846 = sshll.u32 [#allocation22], 4
      %s2847 = int_to_ptr.vmem [resolvable:$true] %s2846
      %2852 = dma.vmem_to_hbm [thread:$0]  %s2847, 2048, %s12, [#allocation4], 128, 128, 8
    $region101: #{tpu_custom_call.1} parent=1 // pred_fallthru
      _
    // Predicated region
    $region102: #{tpu_custom_call.1} parent=1 // pred_check
      _
    $region103: #{tpu_custom_call.1} parent=1 // pred_check_branch
      %2854 = sbr.rel (0) target = $region105
    $region104: #{tpu_custom_call.1} parent=1 // pred_region
      %2855 = dma.done [#allocation4], 2048
    $region105: #{tpu_custom_call.1} parent=1 // pred_fallthru
      _
    %2856 = vsyncpa [#allocation3], 1
    %2857 = vsyncpa [#allocation6], 1
    %2858 = vsyncpa [#allocation9], 1
    %2859 = vsyncpa [#allocation12], 1
    %2860 = vsyncpa [#allocation15], 1
    %2861 = vsyncpa [#allocation18], 1
    %2862 = vsyncpa [#allocation21], 1
    %2863 = vsyncpa [#allocation4], 1

</llo_original>
